<compile_context>
chip_gen: v5e
topology: v5e:2x2
jax: 0.10.0
libtpu: 0.0.40
codegen_flags: <defaults>
</compile_context>

<pallas_src>
import functools

import jax
import jax.numpy as jnp
import numpy as np
from jax.experimental import pallas as pl
from jax.experimental.pallas import tpu as pltpu


def mha_kernel(q_ref, k_ref, v_ref,
               wq_ref, wk_ref, wv_ref, wfc_ref,
               gamma_ref, beta_ref,
               out_ref, *attn_refs,
               n_head, d_k, d_v, block_b, seq_len, matmul_dtype):
    """One grid step == `block_b` batch elements, flattened to block_b*L rows so the
    projection / FC matmuls present a large M and lane-dense N/K to the MXU."""
    L = seq_len
    H = n_head
    D = q_ref.shape[-1]
    M = block_b * L
    md = matmul_dtype

    # Residual stays f32; matmul operands are cast to `md` (bf16 by default) with
    # f32 accumulation (preferred_element_type).
    q_res = q_ref[...].reshape(M, D)
    q_in = q_res.astype(md)
    k_in = k_ref[...].reshape(M, D).astype(md)
    v_in = v_ref[...].reshape(M, D).astype(md)

    # Fused projections: one lane-dense matmul per tensor (N = H*d_k / H*d_v)
    # instead of H narrow per-head dots.
    qp = jnp.dot(q_in, wq_ref[...].astype(md), preferred_element_type=jnp.float32)
    kp = jnp.dot(k_in, wk_ref[...].astype(md), preferred_element_type=jnp.float32)
    vp = jnp.dot(v_in, wv_ref[...].astype(md), preferred_element_type=jnp.float32)

    qp = qp * (1.0 / (d_k ** 0.5))   # temperature = sqrt(d_k), applied once

    ctx_parts = []
    # Static unroll over heads only for the attention math; the heavy matmuls
    # (projections / FC) are already fused across heads.
    # TODO(synk): for large L / H, make the head loop a grid axis + flash-style
    #             (q-tile, kv-tile) tiling with 128-multiple lane dims.
    for h in range(H):
        qh = qp[:, h * d_k:(h + 1) * d_k].reshape(block_b, L, d_k).astype(md)
        kh = kp[:, h * d_k:(h + 1) * d_k].reshape(block_b, L, d_k).astype(md)
        vh = vp[:, h * d_v:(h + 1) * d_v].reshape(block_b, L, d_v).astype(md)

        # Scores: contract last dims directly (no .T materialization).
        s = jnp.einsum('bqe,bke->bqk', qh, kh,
                       preferred_element_type=jnp.float32)          # (bb, L, L) f32
        # TODO(synk): mask support (masked_fill(-1e9) before max/exp) omitted;
        #             this kernel matches the PyTorch module with mask=None.

        # Numerically stable softmax in f32 with EXACT normalization — attn is a
        # module output, so no approx reciprocal here (previous accuracy failure).
        row_max = jnp.max(s, axis=-1, keepdims=True)
        p = jnp.exp(s - row_max)
        attn = p / jnp.sum(p, axis=-1, keepdims=True)

        if attn_refs:
            attn_refs[0][:, h] = attn.astype(attn_refs[0].dtype)

        ctx_h = jnp.einsum('bqk,bke->bqe', attn.astype(md), vh,
                           preferred_element_type=jnp.float32)      # (bb, L, d_v)
        ctx_parts.append(ctx_h.reshape(M, d_v))

    # Fused output projection: one (M, H*d_v) @ (H*d_v, D) matmul.
    ctx = jnp.concatenate(ctx_parts, axis=-1).astype(md)
    o = jnp.dot(ctx, wfc_ref[...].astype(md), preferred_element_type=jnp.float32)

    # Dropout is identity in eval mode.  Residual + LayerNorm (eps=1e-6) in f32.
    o = o + q_res
    mean = jnp.mean(o, axis=-1, keepdims=True)
    var = jnp.mean((o - mean) ** 2, axis=-1, keepdims=True)
    o = (o - mean) * jax.lax.rsqrt(var + 1e-6)
    o = o * gamma_ref[...] + beta_ref[...]
    out_ref[...] = o.reshape(block_b, L, D).astype(out_ref.dtype)


def _vmem_capacity_bytes():
    try:
        return int(pltpu.get_tpu_info().vmem_capacity_bytes)
    except Exception:
        return 64 * 1024 * 1024   # conservative default (v7x per-core VMEM)


def multi_head_attention(q, k, v, wq, wk, wv, wfc, gamma, beta, *,
                         n_head, d_k, d_v, block_b=None,
                         matmul_dtype=jnp.bfloat16,
                         return_attn=True, attn_dtype=jnp.float32):
    B, L, D = q.shape
    assert k.shape == (B, L, D) and v.shape == (B, L, D), \
        "this kernel assumes len_q == len_k == len_v (self-attention layout)"
    # TODO(synk): mask and training-mode dropout are not implemented (eval mode,
    #             mask=None only), matching the synthetic example below.

    attn_itemsize = np.dtype(attn_dtype).itemsize if return_attn else 0
    capacity = _vmem_capacity_bytes()
    budget = int(0.6 * capacity)   # headroom for compiler temporaries / spills

    def step_bytes(bb):
        """Per-grid-step VMEM estimate (includes the bb*H*L^2 attention blocks)."""
        M = bb * L
        qkv_out = 4 * 2 * M * D * 4                              # q/k/v/out, double-buffered
        attn_out = 2 * bb * n_head * L * L * attn_itemsize       # attn block, double-buffered
        weights = (2 * D * n_head * d_k + 2 * D * n_head * d_v + 2 * D) * 4
        tmps = (3 * M * n_head * d_k + 2 * M * n_head * d_v) * 4  # qp/kp/vp + ctx copies (f32)
        tmps += 4 * bb * L * L * 4                                # s/p/attn temporaries
        return qkv_out + attn_out + weights + tmps

    if block_b is None:
        # Keep >= 2 grid steps when B >= 2 so the "parallel" batch axis can be
        # sharded across both v7x TensorCores.
        max_bb = B if B < 2 else max(1, B // 2)
        block_b = 1
        for bb in range(max_bb, 0, -1):
            if B % bb == 0 and step_bytes(bb) <= budget:
                block_b = bb
                break
    assert B % block_b == 0, "block_b must divide the batch size"

    vmem_limit = int(min(0.9 * capacity,
                         max(48 * 1024 * 1024, 2 * step_bytes(block_b))))

    gamma2 = gamma.reshape(1, D)
    beta2 = beta.reshape(1, D)
    grid = (B // block_b,)

    kernel = functools.partial(
        mha_kernel, n_head=n_head, d_k=d_k, d_v=d_v,
        block_b=block_b, seq_len=L, matmul_dtype=matmul_dtype)

    out_shapes = [jax.ShapeDtypeStruct((B, L, D), jnp.float32)]
    out_specs = [pl.BlockSpec((block_b, L, D), lambda b: (b, 0, 0))]
    if return_attn:
        out_shapes.append(jax.ShapeDtypeStruct((B, n_head, L, L), attn_dtype))
        out_specs.append(pl.BlockSpec((block_b, n_head, L, L),
                                      lambda b: (b, 0, 0, 0)))

    def run(single_buffer_weights):
        def const_spec(shape):
            idx = lambda b: (0,) * len(shape)
            if single_buffer_weights and hasattr(pl, "Buffered"):
                # Grid-invariant operands: no need to double-buffer them.
                return pl.BlockSpec(shape, idx, pipeline_mode=pl.Buffered(1))
            return pl.BlockSpec(shape, idx)

        in_specs = [
            pl.BlockSpec((block_b, L, D), lambda b: (b, 0, 0)),   # q
            pl.BlockSpec((block_b, L, D), lambda b: (b, 0, 0)),   # k
            pl.BlockSpec((block_b, L, D), lambda b: (b, 0, 0)),   # v
            const_spec(wq.shape), const_spec(wk.shape),
            const_spec(wv.shape), const_spec(wfc.shape),
            const_spec(gamma2.shape), const_spec(beta2.shape),
        ]
        fn = pl.pallas_call(
            kernel,
            out_shape=tuple(out_shapes) if return_attn else out_shapes[0],
            grid_spec=pltpu.PrefetchScalarGridSpec(
                num_scalar_prefetch=0,
                grid=grid,
                in_specs=in_specs,
                out_specs=out_specs if return_attn else out_specs[0],
            ),
            compiler_params=pltpu.CompilerParams(
                dimension_semantics=("parallel",),
                vmem_limit_bytes=vmem_limit,
            ),
        )
        return fn(q, k, v, wq, wk, wv, wfc, gamma2, beta2)

    try:
        res = run(True)
    except Exception:
        # Fallback for Pallas versions where pl.Buffered(1) on grid-invariant
        # inputs is rejected; correctness is unaffected.
        res = run(False)

    if return_attn:
        out, attn = res
        return out, attn
    return res, None


def reference(q, k, v, wq, wk, wv, wfc, gamma, beta, *, n_head, d_k, d_v):
    """Pure-JAX reference mirroring the PyTorch forward (eval mode, mask=None)."""
    hi = jax.lax.Precision.HIGHEST
    B, Lq, D = q.shape
    residual = q
    qh = jnp.einsum('bld,de->ble', q, wq, precision=hi).reshape(
        B, Lq, n_head, d_k).transpose(0, 2, 1, 3)
    kh = jnp.einsum('bld,de->ble', k, wk, precision=hi).reshape(
        B, k.shape[1], n_head, d_k).transpose(0, 2, 1, 3)
    vh = jnp.einsum('bld,de->ble', v, wv, precision=hi).reshape(
        B, v.shape[1], n_head, d_v).transpose(0, 2, 1, 3)
    s = jnp.einsum('bhqd,bhkd->bhqk', qh / (d_k ** 0.5), kh, precision=hi)
    attn = jax.nn.softmax(s, axis=-1)
    ctx = jnp.einsum('bhqk,bhkd->bhqd', attn, vh, precision=hi)
    ctx = ctx.transpose(0, 2, 1, 3).reshape(B, Lq, n_head * d_v)
    o = jnp.einsum('ble,ed->bld', ctx, wfc, precision=hi) + residual
    mean = jnp.mean(o, axis=-1, keepdims=True)
    var = jnp.mean((o - mean) ** 2, axis=-1, keepdims=True)
    o = (o - mean) / jnp.sqrt(var + 1e-6)
    return o * gamma + beta, attn


if __name__ == "__main__":
    # Small, deterministic config
    B, L, d_model = 2, 8, 32
    n_head, d_k, d_v = 4, 8, 8

    key = jax.random.PRNGKey(0)
    kq, kk, kv, kwq, kwk, kwv, kwf = jax.random.split(key, 7)

    q = jax.random.normal(kq, (B, L, d_model), dtype=jnp.float32)
    k = jax.random.normal(kk, (B, L, d_model), dtype=jnp.float32)
    v = jax.random.normal(kv, (B, L, d_model), dtype=jnp.float32)

    # Deterministic synthetic weights, stored as (in_features, out_features).
    init = lambda kk_, shp: (jax.random.normal(kk_, shp, dtype=jnp.float32)
                             * (1.0 / np.sqrt(shp[0])))
    wq = init(kwq, (d_model, n_head * d_k))
    wk = init(kwk, (d_model, n_head * d_k))
    wv = init(kwv, (d_model, n_head * d_v))
    wfc = init(kwf, (n_head * d_v, d_model))
    gamma = jnp.ones((d_model,), dtype=jnp.float32)   # nn.LayerNorm defaults
    beta = jnp.zeros((d_model,), dtype=jnp.float32)

    out_exp, attn_exp = reference(q, k, v, wq, wk, wv, wfc, gamma, beta,
                                  n_head=n_head, d_k=d_k, d_v=d_v)

    # 1) f32-operand path: validated tightly against the f32 reference
    #    (softmax now uses an exact divide).
    out32, attn32 = multi_head_attention(
        q, k, v, wq, wk, wv, wfc, gamma, beta,
        n_head=n_head, d_k=d_k, d_v=d_v, matmul_dtype=jnp.float32)
    jax.block_until_ready(out32)
    jax.block_until_ready(attn32)
    np.testing.assert_allclose(np.asarray(out32), np.asarray(out_exp),
                               rtol=2e-3, atol=2e-3)
    np.testing.assert_allclose(np.asarray(attn32), np.asarray(attn_exp),
                               rtol=2e-3, atol=2e-3)

    # 2) bf16-operand / f32-accumulation path (default, MXU-peak feed): coarse
    #    sanity bound — the bf16 operand rounding dominates the error budget.
    outbf, attnbf = multi_head_attention(
        q, k, v, wq, wk, wv, wfc, gamma, beta,
        n_head=n_head, d_k=d_k, d_v=d_v)   # matmul_dtype defaults to bfloat16
    jax.block_until_ready(outbf)
    jax.block_until_ready(attnbf)
    np.testing.assert_allclose(np.asarray(outbf), np.asarray(out_exp),
                               rtol=1e-1, atol=1e-1)
    np.testing.assert_allclose(np.asarray(attnbf), np.asarray(attn_exp),
                               rtol=1e-1, atol=1e-1)

    print("KERNEL_OK")
</pallas_src>

<mosaic_0001>
module attributes {stable_mosaic.version = 11 : i64} {
  func.func @mha_kernel(%arg0: i32, %arg1: memref<1x8x32xf32, #tpu.memory_space<vmem>>, %arg2: memref<1x8x32xf32, #tpu.memory_space<vmem>>, %arg3: memref<1x8x32xf32, #tpu.memory_space<vmem>>, %arg4: memref<32x32xf32, #tpu.memory_space<vmem>>, %arg5: memref<32x32xf32, #tpu.memory_space<vmem>>, %arg6: memref<32x32xf32, #tpu.memory_space<vmem>>, %arg7: memref<32x32xf32, #tpu.memory_space<vmem>>, %arg8: memref<1x32xf32, #tpu.memory_space<vmem>>, %arg9: memref<1x32xf32, #tpu.memory_space<vmem>>, %arg10: memref<1x8x32xf32, #tpu.memory_space<vmem>>, %arg11: memref<1x4x8x8xf32, #tpu.memory_space<vmem>>) attributes {dimension_semantics = [#tpu.dimension_semantics<parallel>], iteration_bounds = array<i64: 2>, scalar_prefetch = 0 : i64, scratch_operands = 0 : i64, tpu.core_type = #tpu.core_type<tc>, window_params = [{transform_indices = @transform_0, window_bounds = array<i64: 1, 8, 32>}, {transform_indices = @transform_1, window_bounds = array<i64: 1, 8, 32>}, {transform_indices = @transform_2, window_bounds = array<i64: 1, 8, 32>}, {pipeline_mode = #tpu.pipeline_mode<synchronous>, transform_indices = @transform_3, window_bounds = array<i64: 32, 32>}, {pipeline_mode = #tpu.pipeline_mode<synchronous>, transform_indices = @transform_4, window_bounds = array<i64: 32, 32>}, {pipeline_mode = #tpu.pipeline_mode<synchronous>, transform_indices = @transform_5, window_bounds = array<i64: 32, 32>}, {pipeline_mode = #tpu.pipeline_mode<synchronous>, transform_indices = @transform_6, window_bounds = array<i64: 32, 32>}, {pipeline_mode = #tpu.pipeline_mode<synchronous>, transform_indices = @transform_7, window_bounds = array<i64: 1, 32>}, {pipeline_mode = #tpu.pipeline_mode<synchronous>, transform_indices = @transform_8, window_bounds = array<i64: 1, 32>}, {transform_indices = @transform_9, window_bounds = array<i64: 1, 8, 32>}, {transform_indices = @transform_10, window_bounds = array<i64: 1, 4, 8, 8>}]} {
    %c0 = arith.constant 0 : index
    %c0_0 = arith.constant 0 : index
    %c0_1 = arith.constant 0 : index
    %0 = vector.load %arg1[%c0, %c0_0, %c0_1] : memref<1x8x32xf32, #tpu.memory_space<vmem>>, vector<1x8x32xf32>
    %1 = vector.shape_cast %0 : vector<1x8x32xf32> to vector<8x32xf32>
    %c0_2 = arith.constant 0 : index
    %c0_3 = arith.constant 0 : index
    %c0_4 = arith.constant 0 : index
    %2 = vector.load %arg2[%c0_2, %c0_3, %c0_4] : memref<1x8x32xf32, #tpu.memory_space<vmem>>, vector<1x8x32xf32>
    %3 = vector.shape_cast %2 : vector<1x8x32xf32> to vector<8x32xf32>
    %c0_5 = arith.constant 0 : index
    %c0_6 = arith.constant 0 : index
    %c0_7 = arith.constant 0 : index
    %4 = vector.load %arg3[%c0_5, %c0_6, %c0_7] : memref<1x8x32xf32, #tpu.memory_space<vmem>>, vector<1x8x32xf32>
    %5 = vector.shape_cast %4 : vector<1x8x32xf32> to vector<8x32xf32>
    %c0_8 = arith.constant 0 : index
    %c0_9 = arith.constant 0 : index
    %6 = vector.load %arg4[%c0_8, %c0_9] : memref<32x32xf32, #tpu.memory_space<vmem>>, vector<32x32xf32>
    %cst = arith.constant dense<0.000000e+00> : vector<8x32xf32>
    %7 = tpu.matmul %1, %6, %cst {dimension_numbers = #tpu.dot_dimension_numbers<[1], [0], [0], [1], [0, 0, 1, 1], [], []>} : vector<8x32xf32>, vector<32x32xf32>, vector<8x32xf32> -> vector<8x32xf32>
    %c0_10 = arith.constant 0 : index
    %c0_11 = arith.constant 0 : index
    %8 = vector.load %arg5[%c0_10, %c0_11] : memref<32x32xf32, #tpu.memory_space<vmem>>, vector<32x32xf32>
    %cst_12 = arith.constant dense<0.000000e+00> : vector<8x32xf32>
    %9 = tpu.matmul %3, %8, %cst_12 {dimension_numbers = #tpu.dot_dimension_numbers<[1], [0], [0], [1], [0, 0, 1, 1], [], []>} : vector<8x32xf32>, vector<32x32xf32>, vector<8x32xf32> -> vector<8x32xf32>
    %c0_13 = arith.constant 0 : index
    %c0_14 = arith.constant 0 : index
    %10 = vector.load %arg6[%c0_13, %c0_14] : memref<32x32xf32, #tpu.memory_space<vmem>>, vector<32x32xf32>
    %cst_15 = arith.constant dense<0.000000e+00> : vector<8x32xf32>
    %11 = tpu.matmul %5, %10, %cst_15 {dimension_numbers = #tpu.dot_dimension_numbers<[1], [0], [0], [1], [0, 0, 1, 1], [], []>} : vector<8x32xf32>, vector<32x32xf32>, vector<8x32xf32> -> vector<8x32xf32>
    %cst_16 = arith.constant 0.353553385 : f32
    %12 = vector.broadcast %cst_16 : f32 to vector<8x32xf32>
    %13 = arith.mulf %7, %12 : vector<8x32xf32>
    %14 = vector.extract_strided_slice %13 {offsets = [0, 0], sizes = [8, 8], strides = [1, 1]} : vector<8x32xf32> to vector<8x8xf32>
    %15 = vector.shape_cast %14 : vector<8x8xf32> to vector<1x8x8xf32>
    %16 = vector.extract_strided_slice %9 {offsets = [0, 0], sizes = [8, 8], strides = [1, 1]} : vector<8x32xf32> to vector<8x8xf32>
    %17 = vector.shape_cast %16 : vector<8x8xf32> to vector<1x8x8xf32>
    %18 = vector.extract_strided_slice %11 {offsets = [0, 0], sizes = [8, 8], strides = [1, 1]} : vector<8x32xf32> to vector<8x8xf32>
    %19 = vector.shape_cast %18 : vector<8x8xf32> to vector<1x8x8xf32>
    "tpu.trace_start"() <{level = 10 : i32, message = "bqe,bke->bqk"}> : () -> ()
    %cst_17 = arith.constant dense<0.000000e+00> : vector<1x8x8xf32>
    %20 = tpu.matmul %15, %17, %cst_17 {dimension_numbers = #tpu.dot_dimension_numbers<[2], [2], [1], [1], [0, 0, 0, 1, 1, 1], [0], [0]>} : vector<1x8x8xf32>, vector<1x8x8xf32>, vector<1x8x8xf32> -> vector<1x8x8xf32>
    "tpu.trace_stop"() : () -> ()
    %cst_18 = arith.constant dense<0xFF800000> : vector<1x8xf32>
    %21 = vector.multi_reduction <maximumf>, %20, %cst_18 [2] : vector<1x8x8xf32> to vector<1x8xf32>
    %22 = vector.shape_cast %21 : vector<1x8xf32> to vector<1x8x1xf32>
    %23 = vector.broadcast %22 : vector<1x8x1xf32> to vector<1x8x8xf32>
    %24 = arith.subf %20, %23 : vector<1x8x8xf32>
    %25 = math.exp %24 : vector<1x8x8xf32>
    %cst_19 = arith.constant dense<0.000000e+00> : vector<1x8xf32>
    %26 = vector.multi_reduction <add>, %25, %cst_19 [2] : vector<1x8x8xf32> to vector<1x8xf32>
    %27 = vector.shape_cast %26 : vector<1x8xf32> to vector<1x8x1xf32>
    %28 = vector.broadcast %27 : vector<1x8x1xf32> to vector<1x8x8xf32>
    %29 = arith.divf %25, %28 : vector<1x8x8xf32>
    %c0_20 = arith.constant 0 : index
    %c0_21 = arith.constant 0 : index
    %c0_22 = arith.constant 0 : index
    %c0_23 = arith.constant 0 : index
    %30 = vector.load %arg11[%c0_20, %c0_21, %c0_22, %c0_23] : memref<1x4x8x8xf32, #tpu.memory_space<vmem>>, vector<1x1x8x8xf32>
    %31 = vector.shape_cast %30 : vector<1x1x8x8xf32> to vector<1x8x8xf32>
    %32 = vector.shape_cast %29 : vector<1x8x8xf32> to vector<1x1x8x8xf32>
    tpu.vector_store %arg11[%c0_20, %c0_21, %c0_22, %c0_23], %32 {strides = array<i32>} : memref<1x4x8x8xf32, #tpu.memory_space<vmem>>, vector<1x1x8x8xf32>,
    "tpu.trace_start"() <{level = 10 : i32, message = "bqk,bke->bqe"}> : () -> ()
    %cst_24 = arith.constant dense<0.000000e+00> : vector<1x8x8xf32>
    %33 = tpu.matmul %29, %19, %cst_24 {dimension_numbers = #tpu.dot_dimension_numbers<[2], [1], [1], [2], [0, 0, 0, 1, 1, 2], [0], [0]>} : vector<1x8x8xf32>, vector<1x8x8xf32>, vector<1x8x8xf32> -> vector<1x8x8xf32>
    "tpu.trace_stop"() : () -> ()
    %34 = vector.shape_cast %33 : vector<1x8x8xf32> to vector<8x8xf32>
    %35 = vector.extract_strided_slice %13 {offsets = [0, 8], sizes = [8, 8], strides = [1, 1]} : vector<8x32xf32> to vector<8x8xf32>
    %36 = vector.shape_cast %35 : vector<8x8xf32> to vector<1x8x8xf32>
    %37 = vector.extract_strided_slice %9 {offsets = [0, 8], sizes = [8, 8], strides = [1, 1]} : vector<8x32xf32> to vector<8x8xf32>
    %38 = vector.shape_cast %37 : vector<8x8xf32> to vector<1x8x8xf32>
    %39 = vector.extract_strided_slice %11 {offsets = [0, 8], sizes = [8, 8], strides = [1, 1]} : vector<8x32xf32> to vector<8x8xf32>
    %40 = vector.shape_cast %39 : vector<8x8xf32> to vector<1x8x8xf32>
    "tpu.trace_start"() <{level = 10 : i32, message = "bqe,bke->bqk"}> : () -> ()
    %cst_25 = arith.constant dense<0.000000e+00> : vector<1x8x8xf32>
    %41 = tpu.matmul %36, %38, %cst_25 {dimension_numbers = #tpu.dot_dimension_numbers<[2], [2], [1], [1], [0, 0, 0, 1, 1, 1], [0], [0]>} : vector<1x8x8xf32>, vector<1x8x8xf32>, vector<1x8x8xf32> -> vector<1x8x8xf32>
    "tpu.trace_stop"() : () -> ()
    %cst_26 = arith.constant dense<0xFF800000> : vector<1x8xf32>
    %42 = vector.multi_reduction <maximumf>, %41, %cst_26 [2] : vector<1x8x8xf32> to vector<1x8xf32>
    %43 = vector.shape_cast %42 : vector<1x8xf32> to vector<1x8x1xf32>
    %44 = vector.broadcast %43 : vector<1x8x1xf32> to vector<1x8x8xf32>
    %45 = arith.subf %41, %44 : vector<1x8x8xf32>
    %46 = math.exp %45 : vector<1x8x8xf32>
    %cst_27 = arith.constant dense<0.000000e+00> : vector<1x8xf32>
    %47 = vector.multi_reduction <add>, %46, %cst_27 [2] : vector<1x8x8xf32> to vector<1x8xf32>
    %48 = vector.shape_cast %47 : vector<1x8xf32> to vector<1x8x1xf32>
    %49 = vector.broadcast %48 : vector<1x8x1xf32> to vector<1x8x8xf32>
    %50 = arith.divf %46, %49 : vector<1x8x8xf32>
    %c0_28 = arith.constant 0 : index
    %c1 = arith.constant 1 : index
    %c0_29 = arith.constant 0 : index
    %c0_30 = arith.constant 0 : index
    %51 = vector.load %arg11[%c0_28, %c1, %c0_29, %c0_30] : memref<1x4x8x8xf32, #tpu.memory_space<vmem>>, vector<1x1x8x8xf32>
    %52 = vector.shape_cast %51 : vector<1x1x8x8xf32> to vector<1x8x8xf32>
    %53 = vector.shape_cast %50 : vector<1x8x8xf32> to vector<1x1x8x8xf32>
    tpu.vector_store %arg11[%c0_28, %c1, %c0_29, %c0_30], %53 {strides = array<i32>} : memref<1x4x8x8xf32, #tpu.memory_space<vmem>>, vector<1x1x8x8xf32>,
    "tpu.trace_start"() <{level = 10 : i32, message = "bqk,bke->bqe"}> : () -> ()
    %cst_31 = arith.constant dense<0.000000e+00> : vector<1x8x8xf32>
    %54 = tpu.matmul %50, %40, %cst_31 {dimension_numbers = #tpu.dot_dimension_numbers<[2], [1], [1], [2], [0, 0, 0, 1, 1, 2], [0], [0]>} : vector<1x8x8xf32>, vector<1x8x8xf32>, vector<1x8x8xf32> -> vector<1x8x8xf32>
    "tpu.trace_stop"() : () -> ()
    %55 = vector.shape_cast %54 : vector<1x8x8xf32> to vector<8x8xf32>
    %56 = vector.extract_strided_slice %13 {offsets = [0, 16], sizes = [8, 8], strides = [1, 1]} : vector<8x32xf32> to vector<8x8xf32>
    %57 = vector.shape_cast %56 : vector<8x8xf32> to vector<1x8x8xf32>
    %58 = vector.extract_strided_slice %9 {offsets = [0, 16], sizes = [8, 8], strides = [1, 1]} : vector<8x32xf32> to vector<8x8xf32>
    %59 = vector.shape_cast %58 : vector<8x8xf32> to vector<1x8x8xf32>
    %60 = vector.extract_strided_slice %11 {offsets = [0, 16], sizes = [8, 8], strides = [1, 1]} : vector<8x32xf32> to vector<8x8xf32>
    %61 = vector.shape_cast %60 : vector<8x8xf32> to vector<1x8x8xf32>
    "tpu.trace_start"() <{level = 10 : i32, message = "bqe,bke->bqk"}> : () -> ()
    %cst_32 = arith.constant dense<0.000000e+00> : vector<1x8x8xf32>
    %62 = tpu.matmul %57, %59, %cst_32 {dimension_numbers = #tpu.dot_dimension_numbers<[2], [2], [1], [1], [0, 0, 0, 1, 1, 1], [0], [0]>} : vector<1x8x8xf32>, vector<1x8x8xf32>, vector<1x8x8xf32> -> vector<1x8x8xf32>
    "tpu.trace_stop"() : () -> ()
    %cst_33 = arith.constant dense<0xFF800000> : vector<1x8xf32>
    %63 = vector.multi_reduction <maximumf>, %62, %cst_33 [2] : vector<1x8x8xf32> to vector<1x8xf32>
    %64 = vector.shape_cast %63 : vector<1x8xf32> to vector<1x8x1xf32>
    %65 = vector.broadcast %64 : vector<1x8x1xf32> to vector<1x8x8xf32>
    %66 = arith.subf %62, %65 : vector<1x8x8xf32>
    %67 = math.exp %66 : vector<1x8x8xf32>
    %cst_34 = arith.constant dense<0.000000e+00> : vector<1x8xf32>
    %68 = vector.multi_reduction <add>, %67, %cst_34 [2] : vector<1x8x8xf32> to vector<1x8xf32>
    %69 = vector.shape_cast %68 : vector<1x8xf32> to vector<1x8x1xf32>
    %70 = vector.broadcast %69 : vector<1x8x1xf32> to vector<1x8x8xf32>
    %71 = arith.divf %67, %70 : vector<1x8x8xf32>
    %c0_35 = arith.constant 0 : index
    %c2 = arith.constant 2 : index
    %c0_36 = arith.constant 0 : index
    %c0_37 = arith.constant 0 : index
    %72 = vector.load %arg11[%c0_35, %c2, %c0_36, %c0_37] : memref<1x4x8x8xf32, #tpu.memory_space<vmem>>, vector<1x1x8x8xf32>
    %73 = vector.shape_cast %72 : vector<1x1x8x8xf32> to vector<1x8x8xf32>
    %74 = vector.shape_cast %71 : vector<1x8x8xf32> to vector<1x1x8x8xf32>
    tpu.vector_store %arg11[%c0_35, %c2, %c0_36, %c0_37], %74 {strides = array<i32>} : memref<1x4x8x8xf32, #tpu.memory_space<vmem>>, vector<1x1x8x8xf32>,
    "tpu.trace_start"() <{level = 10 : i32, message = "bqk,bke->bqe"}> : () -> ()
    %cst_38 = arith.constant dense<0.000000e+00> : vector<1x8x8xf32>
    %75 = tpu.matmul %71, %61, %cst_38 {dimension_numbers = #tpu.dot_dimension_numbers<[2], [1], [1], [2], [0, 0, 0, 1, 1, 2], [0], [0]>} : vector<1x8x8xf32>, vector<1x8x8xf32>, vector<1x8x8xf32> -> vector<1x8x8xf32>
    "tpu.trace_stop"() : () -> ()
    %76 = vector.shape_cast %75 : vector<1x8x8xf32> to vector<8x8xf32>
    %77 = vector.extract_strided_slice %13 {offsets = [0, 24], sizes = [8, 8], strides = [1, 1]} : vector<8x32xf32> to vector<8x8xf32>
    %78 = vector.shape_cast %77 : vector<8x8xf32> to vector<1x8x8xf32>
    %79 = vector.extract_strided_slice %9 {offsets = [0, 24], sizes = [8, 8], strides = [1, 1]} : vector<8x32xf32> to vector<8x8xf32>
    %80 = vector.shape_cast %79 : vector<8x8xf32> to vector<1x8x8xf32>
    %81 = vector.extract_strided_slice %11 {offsets = [0, 24], sizes = [8, 8], strides = [1, 1]} : vector<8x32xf32> to vector<8x8xf32>
    %82 = vector.shape_cast %81 : vector<8x8xf32> to vector<1x8x8xf32>
    "tpu.trace_start"() <{level = 10 : i32, message = "bqe,bke->bqk"}> : () -> ()
    %cst_39 = arith.constant dense<0.000000e+00> : vector<1x8x8xf32>
    %83 = tpu.matmul %78, %80, %cst_39 {dimension_numbers = #tpu.dot_dimension_numbers<[2], [2], [1], [1], [0, 0, 0, 1, 1, 1], [0], [0]>} : vector<1x8x8xf32>, vector<1x8x8xf32>, vector<1x8x8xf32> -> vector<1x8x8xf32>
    "tpu.trace_stop"() : () -> ()
    %cst_40 = arith.constant dense<0xFF800000> : vector<1x8xf32>
    %84 = vector.multi_reduction <maximumf>, %83, %cst_40 [2] : vector<1x8x8xf32> to vector<1x8xf32>
    %85 = vector.shape_cast %84 : vector<1x8xf32> to vector<1x8x1xf32>
    %86 = vector.broadcast %85 : vector<1x8x1xf32> to vector<1x8x8xf32>
    %87 = arith.subf %83, %86 : vector<1x8x8xf32>
    %88 = math.exp %87 : vector<1x8x8xf32>
    %cst_41 = arith.constant dense<0.000000e+00> : vector<1x8xf32>
    %89 = vector.multi_reduction <add>, %88, %cst_41 [2] : vector<1x8x8xf32> to vector<1x8xf32>
    %90 = vector.shape_cast %89 : vector<1x8xf32> to vector<1x8x1xf32>
    %91 = vector.broadcast %90 : vector<1x8x1xf32> to vector<1x8x8xf32>
    %92 = arith.divf %88, %91 : vector<1x8x8xf32>
    %c0_42 = arith.constant 0 : index
    %c3 = arith.constant 3 : index
    %c0_43 = arith.constant 0 : index
    %c0_44 = arith.constant 0 : index
    %93 = vector.load %arg11[%c0_42, %c3, %c0_43, %c0_44] : memref<1x4x8x8xf32, #tpu.memory_space<vmem>>, vector<1x1x8x8xf32>
    %94 = vector.shape_cast %93 : vector<1x1x8x8xf32> to vector<1x8x8xf32>
    %95 = vector.shape_cast %92 : vector<1x8x8xf32> to vector<1x1x8x8xf32>
    tpu.vector_store %arg11[%c0_42, %c3, %c0_43, %c0_44], %95 {strides = array<i32>} : memref<1x4x8x8xf32, #tpu.memory_space<vmem>>, vector<1x1x8x8xf32>,
    "tpu.trace_start"() <{level = 10 : i32, message = "bqk,bke->bqe"}> : () -> ()
    %cst_45 = arith.constant dense<0.000000e+00> : vector<1x8x8xf32>
    %96 = tpu.matmul %92, %82, %cst_45 {dimension_numbers = #tpu.dot_dimension_numbers<[2], [1], [1], [2], [0, 0, 0, 1, 1, 2], [0], [0]>} : vector<1x8x8xf32>, vector<1x8x8xf32>, vector<1x8x8xf32> -> vector<1x8x8xf32>
    "tpu.trace_stop"() : () -> ()
    %97 = vector.shape_cast %96 : vector<1x8x8xf32> to vector<8x8xf32>
    %98 = tpu.concatenate %34, %55, %76, %97 in 1 : vector<8x8xf32>, vector<8x8xf32>, vector<8x8xf32>, vector<8x8xf32> -> vector<8x32xf32>
    %c0_46 = arith.constant 0 : index
    %c0_47 = arith.constant 0 : index
    %99 = vector.load %arg7[%c0_46, %c0_47] : memref<32x32xf32, #tpu.memory_space<vmem>>, vector<32x32xf32>
    %cst_48 = arith.constant dense<0.000000e+00> : vector<8x32xf32>
    %100 = tpu.matmul %98, %99, %cst_48 {dimension_numbers = #tpu.dot_dimension_numbers<[1], [0], [0], [1], [0, 0, 1, 1], [], []>} : vector<8x32xf32>, vector<32x32xf32>, vector<8x32xf32> -> vector<8x32xf32>
    %101 = arith.addf %100, %1 : vector<8x32xf32>
    %cst_49 = arith.constant dense<0.000000e+00> : vector<8xf32>
    %102 = vector.multi_reduction <add>, %101, %cst_49 [1] : vector<8x32xf32> to vector<8xf32>
    %103 = vector.shape_cast %102 : vector<8xf32> to vector<8x1xf32>
    %cst_50 = arith.constant 3.200000e+01 : f32
    %104 = vector.broadcast %cst_50 : f32 to vector<8x1xf32>
    %105 = arith.divf %103, %104 : vector<8x1xf32>
    %106 = vector.broadcast %105 : vector<8x1xf32> to vector<8x32xf32>
    %107 = arith.subf %101, %106 : vector<8x32xf32>
    %108 = arith.mulf %107, %107 : vector<8x32xf32>
    %cst_51 = arith.constant dense<0.000000e+00> : vector<8xf32>
    %109 = vector.multi_reduction <add>, %108, %cst_51 [1] : vector<8x32xf32> to vector<8xf32>
    %110 = vector.shape_cast %109 : vector<8xf32> to vector<8x1xf32>
    %cst_52 = arith.constant 3.200000e+01 : f32
    %111 = vector.broadcast %cst_52 : f32 to vector<8x1xf32>
    %112 = arith.divf %110, %111 : vector<8x1xf32>
    %113 = vector.broadcast %105 : vector<8x1xf32> to vector<8x32xf32>
    %114 = arith.subf %101, %113 : vector<8x32xf32>
    %cst_53 = arith.constant 9.99999997E-7 : f32
    %115 = vector.broadcast %cst_53 : f32 to vector<8x1xf32>
    %116 = arith.addf %112, %115 : vector<8x1xf32>
    %117 = math.rsqrt %116 : vector<8x1xf32>
    %118 = vector.broadcast %117 : vector<8x1xf32> to vector<8x32xf32>
    %119 = arith.mulf %114, %118 : vector<8x32xf32>
    %c0_54 = arith.constant 0 : index
    %c0_55 = arith.constant 0 : index
    %120 = vector.load %arg8[%c0_54, %c0_55] : memref<1x32xf32, #tpu.memory_space<vmem>>, vector<1x32xf32>
    %121 = vector.broadcast %120 : vector<1x32xf32> to vector<8x32xf32>
    %122 = arith.mulf %119, %121 : vector<8x32xf32>
    %c0_56 = arith.constant 0 : index
    %c0_57 = arith.constant 0 : index
    %123 = vector.load %arg9[%c0_56, %c0_57] : memref<1x32xf32, #tpu.memory_space<vmem>>, vector<1x32xf32>
    %124 = vector.broadcast %123 : vector<1x32xf32> to vector<8x32xf32>
    %125 = arith.addf %122, %124 : vector<8x32xf32>
    %126 = vector.shape_cast %125 : vector<8x32xf32> to vector<1x8x32xf32>
    %c0_58 = arith.constant 0 : index
    %c0_59 = arith.constant 0 : index
    %c0_60 = arith.constant 0 : index
    %127 = vector.load %arg10[%c0_58, %c0_59, %c0_60] : memref<1x8x32xf32, #tpu.memory_space<vmem>>, vector<1x8x32xf32>
    tpu.vector_store %arg10[%c0_58, %c0_59, %c0_60], %126 {strides = array<i32>} : memref<1x8x32xf32, #tpu.memory_space<vmem>>, vector<1x8x32xf32>,
    return
  }
  func.func @transform_0(%arg0: i32) -> (i32, i32, i32) {
    %c0_i32 = arith.constant 0 : i32
    %c0_i32_0 = arith.constant 0 : i32
    %c0_i32_1 = arith.constant 0 : i32
    return %arg0, %c0_i32, %c0_i32_0 : i32, i32, i32
  }
  func.func @transform_1(%arg0: i32) -> (i32, i32, i32) {
    %c0_i32 = arith.constant 0 : i32
    %c0_i32_0 = arith.constant 0 : i32
    %c0_i32_1 = arith.constant 0 : i32
    return %arg0, %c0_i32, %c0_i32_0 : i32, i32, i32
  }
  func.func @transform_2(%arg0: i32) -> (i32, i32, i32) {
    %c0_i32 = arith.constant 0 : i32
    %c0_i32_0 = arith.constant 0 : i32
    %c0_i32_1 = arith.constant 0 : i32
    return %arg0, %c0_i32, %c0_i32_0 : i32, i32, i32
  }
  func.func @transform_3(%arg0: i32) -> (i32, i32) {
    %c0_i32 = arith.constant 0 : i32
    %c0_i32_0 = arith.constant 0 : i32
    %c0_i32_1 = arith.constant 0 : i32
    return %c0_i32, %c0_i32_0 : i32, i32
  }
  func.func @transform_4(%arg0: i32) -> (i32, i32) {
    %c0_i32 = arith.constant 0 : i32
    %c0_i32_0 = arith.constant 0 : i32
    %c0_i32_1 = arith.constant 0 : i32
    return %c0_i32, %c0_i32_0 : i32, i32
  }
  func.func @transform_5(%arg0: i32) -> (i32, i32) {
    %c0_i32 = arith.constant 0 : i32
    %c0_i32_0 = arith.constant 0 : i32
    %c0_i32_1 = arith.constant 0 : i32
    return %c0_i32, %c0_i32_0 : i32, i32
  }
  func.func @transform_6(%arg0: i32) -> (i32, i32) {
    %c0_i32 = arith.constant 0 : i32
    %c0_i32_0 = arith.constant 0 : i32
    %c0_i32_1 = arith.constant 0 : i32
    return %c0_i32, %c0_i32_0 : i32, i32
  }
  func.func @transform_7(%arg0: i32) -> (i32, i32) {
    %c0_i32 = arith.constant 0 : i32
    %c0_i32_0 = arith.constant 0 : i32
    %c0_i32_1 = arith.constant 0 : i32
    return %c0_i32, %c0_i32_0 : i32, i32
  }
  func.func @transform_8(%arg0: i32) -> (i32, i32) {
    %c0_i32 = arith.constant 0 : i32
    %c0_i32_0 = arith.constant 0 : i32
    %c0_i32_1 = arith.constant 0 : i32
    return %c0_i32, %c0_i32_0 : i32, i32
  }
  func.func @transform_9(%arg0: i32) -> (i32, i32, i32) {
    %c0_i32 = arith.constant 0 : i32
    %c0_i32_0 = arith.constant 0 : i32
    %c0_i32_1 = arith.constant 0 : i32
    return %arg0, %c0_i32, %c0_i32_0 : i32, i32, i32
  }
  func.func @transform_10(%arg0: i32) -> (i32, i32, i32, i32) {
    %c0_i32 = arith.constant 0 : i32
    %c0_i32_0 = arith.constant 0 : i32
    %c0_i32_1 = arith.constant 0 : i32
    %c0_i32_2 = arith.constant 0 : i32
    return %arg0, %c0_i32, %c0_i32_0, %c0_i32_1 : i32, i32, i32, i32
  }
}

module attributes {stable_mosaic.version = 11 : i64} {
  func.func @mha_kernel(%arg0: i32, %arg1: memref<1x8x32xf32, #tpu.memory_space<vmem>>, %arg2: memref<1x8x32xf32, #tpu.memory_space<vmem>>, %arg3: memref<1x8x32xf32, #tpu.memory_space<vmem>>, %arg4: memref<32x32xf32, #tpu.memory_space<vmem>>, %arg5: memref<32x32xf32, #tpu.memory_space<vmem>>, %arg6: memref<32x32xf32, #tpu.memory_space<vmem>>, %arg7: memref<32x32xf32, #tpu.memory_space<vmem>>, %arg8: memref<1x32xf32, #tpu.memory_space<vmem>>, %arg9: memref<1x32xf32, #tpu.memory_space<vmem>>, %arg10: memref<1x8x32xf32, #tpu.memory_space<vmem>>, %arg11: memref<1x4x8x8xf32, #tpu.memory_space<vmem>>) attributes {dimension_semantics = [#tpu.dimension_semantics<parallel>], iteration_bounds = array<i64: 2>, scalar_prefetch = 0 : i64, scratch_operands = 0 : i64, tpu.core_type = #tpu.core_type<tc>, window_params = [{transform_indices = @transform_0, window_bounds = array<i64: 1, 8, 32>}, {transform_indices = @transform_1, window_bounds = array<i64: 1, 8, 32>}, {transform_indices = @transform_2, window_bounds = array<i64: 1, 8, 32>}, {pipeline_mode = #tpu.pipeline_mode<synchronous>, transform_indices = @transform_3, window_bounds = array<i64: 32, 32>}, {pipeline_mode = #tpu.pipeline_mode<synchronous>, transform_indices = @transform_4, window_bounds = array<i64: 32, 32>}, {pipeline_mode = #tpu.pipeline_mode<synchronous>, transform_indices = @transform_5, window_bounds = array<i64: 32, 32>}, {pipeline_mode = #tpu.pipeline_mode<synchronous>, transform_indices = @transform_6, window_bounds = array<i64: 32, 32>}, {pipeline_mode = #tpu.pipeline_mode<synchronous>, transform_indices = @transform_7, window_bounds = array<i64: 1, 32>}, {pipeline_mode = #tpu.pipeline_mode<synchronous>, transform_indices = @transform_8, window_bounds = array<i64: 1, 32>}, {transform_indices = @transform_9, window_bounds = array<i64: 1, 8, 32>}, {transform_indices = @transform_10, window_bounds = array<i64: 1, 4, 8, 8>}]} {
    %c0 = arith.constant 0 : index
    %c0_0 = arith.constant 0 : index
    %c0_1 = arith.constant 0 : index
    %0 = vector.load %arg1[%c0, %c0_0, %c0_1] : memref<1x8x32xf32, #tpu.memory_space<vmem>>, vector<1x8x32xf32>
    %1 = vector.shape_cast %0 : vector<1x8x32xf32> to vector<8x32xf32>
    %c0_2 = arith.constant 0 : index
    %c0_3 = arith.constant 0 : index
    %c0_4 = arith.constant 0 : index
    %2 = vector.load %arg2[%c0_2, %c0_3, %c0_4] : memref<1x8x32xf32, #tpu.memory_space<vmem>>, vector<1x8x32xf32>
    %3 = vector.shape_cast %2 : vector<1x8x32xf32> to vector<8x32xf32>
    %c0_5 = arith.constant 0 : index
    %c0_6 = arith.constant 0 : index
    %c0_7 = arith.constant 0 : index
    %4 = vector.load %arg3[%c0_5, %c0_6, %c0_7] : memref<1x8x32xf32, #tpu.memory_space<vmem>>, vector<1x8x32xf32>
    %5 = vector.shape_cast %4 : vector<1x8x32xf32> to vector<8x32xf32>
    %c0_8 = arith.constant 0 : index
    %c0_9 = arith.constant 0 : index
    %6 = vector.load %arg4[%c0_8, %c0_9] : memref<32x32xf32, #tpu.memory_space<vmem>>, vector<32x32xf32>
    %cst = arith.constant dense<0.000000e+00> : vector<8x32xf32>
    %7 = tpu.matmul %1, %6, %cst {dimension_numbers = #tpu.dot_dimension_numbers<[1], [0], [0], [1], [0, 0, 1, 1], [], []>} : vector<8x32xf32>, vector<32x32xf32>, vector<8x32xf32> -> vector<8x32xf32>
    %c0_10 = arith.constant 0 : index
    %c0_11 = arith.constant 0 : index
    %8 = vector.load %arg5[%c0_10, %c0_11] : memref<32x32xf32, #tpu.memory_space<vmem>>, vector<32x32xf32>
    %cst_12 = arith.constant dense<0.000000e+00> : vector<8x32xf32>
    %9 = tpu.matmul %3, %8, %cst_12 {dimension_numbers = #tpu.dot_dimension_numbers<[1], [0], [0], [1], [0, 0, 1, 1], [], []>} : vector<8x32xf32>, vector<32x32xf32>, vector<8x32xf32> -> vector<8x32xf32>
    %c0_13 = arith.constant 0 : index
    %c0_14 = arith.constant 0 : index
    %10 = vector.load %arg6[%c0_13, %c0_14] : memref<32x32xf32, #tpu.memory_space<vmem>>, vector<32x32xf32>
    %cst_15 = arith.constant dense<0.000000e+00> : vector<8x32xf32>
    %11 = tpu.matmul %5, %10, %cst_15 {dimension_numbers = #tpu.dot_dimension_numbers<[1], [0], [0], [1], [0, 0, 1, 1], [], []>} : vector<8x32xf32>, vector<32x32xf32>, vector<8x32xf32> -> vector<8x32xf32>
    %cst_16 = arith.constant 0.353553385 : f32
    %12 = vector.broadcast %cst_16 : f32 to vector<8x32xf32>
    %13 = arith.mulf %7, %12 : vector<8x32xf32>
    %14 = vector.extract_strided_slice %13 {offsets = [0, 0], sizes = [8, 8], strides = [1, 1]} : vector<8x32xf32> to vector<8x8xf32>
    %15 = vector.shape_cast %14 : vector<8x8xf32> to vector<1x8x8xf32>
    %16 = vector.extract_strided_slice %9 {offsets = [0, 0], sizes = [8, 8], strides = [1, 1]} : vector<8x32xf32> to vector<8x8xf32>
    %17 = vector.shape_cast %16 : vector<8x8xf32> to vector<1x8x8xf32>
    %18 = vector.extract_strided_slice %11 {offsets = [0, 0], sizes = [8, 8], strides = [1, 1]} : vector<8x32xf32> to vector<8x8xf32>
    %19 = vector.shape_cast %18 : vector<8x8xf32> to vector<1x8x8xf32>
    "tpu.trace_start"() <{level = 10 : i32, message = "bqe,bke->bqk"}> : () -> ()
    %cst_17 = arith.constant dense<0.000000e+00> : vector<1x8x8xf32>
    %20 = tpu.matmul %15, %17, %cst_17 {dimension_numbers = #tpu.dot_dimension_numbers<[2], [2], [1], [1], [0, 0, 0, 1, 1, 1], [0], [0]>} : vector<1x8x8xf32>, vector<1x8x8xf32>, vector<1x8x8xf32> -> vector<1x8x8xf32>
    "tpu.trace_stop"() : () -> ()
    %cst_18 = arith.constant dense<0xFF800000> : vector<1x8xf32>
    %21 = vector.multi_reduction <maximumf>, %20, %cst_18 [2] : vector<1x8x8xf32> to vector<1x8xf32>
    %22 = vector.shape_cast %21 : vector<1x8xf32> to vector<1x8x1xf32>
    %23 = vector.broadcast %22 : vector<1x8x1xf32> to vector<1x8x8xf32>
    %24 = arith.subf %20, %23 : vector<1x8x8xf32>
    %25 = math.exp %24 : vector<1x8x8xf32>
    %cst_19 = arith.constant dense<0.000000e+00> : vector<1x8xf32>
    %26 = vector.multi_reduction <add>, %25, %cst_19 [2] : vector<1x8x8xf32> to vector<1x8xf32>
    %27 = vector.shape_cast %26 : vector<1x8xf32> to vector<1x8x1xf32>
    %28 = vector.broadcast %27 : vector<1x8x1xf32> to vector<1x8x8xf32>
    %29 = arith.divf %25, %28 : vector<1x8x8xf32>
    %c0_20 = arith.constant 0 : index
    %c0_21 = arith.constant 0 : index
    %c0_22 = arith.constant 0 : index
    %c0_23 = arith.constant 0 : index
    %30 = vector.load %arg11[%c0_20, %c0_21, %c0_22, %c0_23] : memref<1x4x8x8xf32, #tpu.memory_space<vmem>>, vector<1x1x8x8xf32>
    %31 = vector.shape_cast %30 : vector<1x1x8x8xf32> to vector<1x8x8xf32>
    %32 = vector.shape_cast %29 : vector<1x8x8xf32> to vector<1x1x8x8xf32>
    tpu.vector_store %arg11[%c0_20, %c0_21, %c0_22, %c0_23], %32 {strides = array<i32>} : memref<1x4x8x8xf32, #tpu.memory_space<vmem>>, vector<1x1x8x8xf32>,
    "tpu.trace_start"() <{level = 10 : i32, message = "bqk,bke->bqe"}> : () -> ()
    %cst_24 = arith.constant dense<0.000000e+00> : vector<1x8x8xf32>
    %33 = tpu.matmul %29, %19, %cst_24 {dimension_numbers = #tpu.dot_dimension_numbers<[2], [1], [1], [2], [0, 0, 0, 1, 1, 2], [0], [0]>} : vector<1x8x8xf32>, vector<1x8x8xf32>, vector<1x8x8xf32> -> vector<1x8x8xf32>
    "tpu.trace_stop"() : () -> ()
    %34 = vector.shape_cast %33 : vector<1x8x8xf32> to vector<8x8xf32>
    %35 = vector.extract_strided_slice %13 {offsets = [0, 8], sizes = [8, 8], strides = [1, 1]} : vector<8x32xf32> to vector<8x8xf32>
    %36 = vector.shape_cast %35 : vector<8x8xf32> to vector<1x8x8xf32>
    %37 = vector.extract_strided_slice %9 {offsets = [0, 8], sizes = [8, 8], strides = [1, 1]} : vector<8x32xf32> to vector<8x8xf32>
    %38 = vector.shape_cast %37 : vector<8x8xf32> to vector<1x8x8xf32>
    %39 = vector.extract_strided_slice %11 {offsets = [0, 8], sizes = [8, 8], strides = [1, 1]} : vector<8x32xf32> to vector<8x8xf32>
    %40 = vector.shape_cast %39 : vector<8x8xf32> to vector<1x8x8xf32>
    "tpu.trace_start"() <{level = 10 : i32, message = "bqe,bke->bqk"}> : () -> ()
    %cst_25 = arith.constant dense<0.000000e+00> : vector<1x8x8xf32>
    %41 = tpu.matmul %36, %38, %cst_25 {dimension_numbers = #tpu.dot_dimension_numbers<[2], [2], [1], [1], [0, 0, 0, 1, 1, 1], [0], [0]>} : vector<1x8x8xf32>, vector<1x8x8xf32>, vector<1x8x8xf32> -> vector<1x8x8xf32>
    "tpu.trace_stop"() : () -> ()
    %cst_26 = arith.constant dense<0xFF800000> : vector<1x8xf32>
    %42 = vector.multi_reduction <maximumf>, %41, %cst_26 [2] : vector<1x8x8xf32> to vector<1x8xf32>
    %43 = vector.shape_cast %42 : vector<1x8xf32> to vector<1x8x1xf32>
    %44 = vector.broadcast %43 : vector<1x8x1xf32> to vector<1x8x8xf32>
    %45 = arith.subf %41, %44 : vector<1x8x8xf32>
    %46 = math.exp %45 : vector<1x8x8xf32>
    %cst_27 = arith.constant dense<0.000000e+00> : vector<1x8xf32>
    %47 = vector.multi_reduction <add>, %46, %cst_27 [2] : vector<1x8x8xf32> to vector<1x8xf32>
    %48 = vector.shape_cast %47 : vector<1x8xf32> to vector<1x8x1xf32>
    %49 = vector.broadcast %48 : vector<1x8x1xf32> to vector<1x8x8xf32>
    %50 = arith.divf %46, %49 : vector<1x8x8xf32>
    %c0_28 = arith.constant 0 : index
    %c1 = arith.constant 1 : index
    %c0_29 = arith.constant 0 : index
    %c0_30 = arith.constant 0 : index
    %51 = vector.load %arg11[%c0_28, %c1, %c0_29, %c0_30] : memref<1x4x8x8xf32, #tpu.memory_space<vmem>>, vector<1x1x8x8xf32>
    %52 = vector.shape_cast %51 : vector<1x1x8x8xf32> to vector<1x8x8xf32>
    %53 = vector.shape_cast %50 : vector<1x8x8xf32> to vector<1x1x8x8xf32>
    tpu.vector_store %arg11[%c0_28, %c1, %c0_29, %c0_30], %53 {strides = array<i32>} : memref<1x4x8x8xf32, #tpu.memory_space<vmem>>, vector<1x1x8x8xf32>,
    "tpu.trace_start"() <{level = 10 : i32, message = "bqk,bke->bqe"}> : () -> ()
    %cst_31 = arith.constant dense<0.000000e+00> : vector<1x8x8xf32>
    %54 = tpu.matmul %50, %40, %cst_31 {dimension_numbers = #tpu.dot_dimension_numbers<[2], [1], [1], [2], [0, 0, 0, 1, 1, 2], [0], [0]>} : vector<1x8x8xf32>, vector<1x8x8xf32>, vector<1x8x8xf32> -> vector<1x8x8xf32>
    "tpu.trace_stop"() : () -> ()
    %55 = vector.shape_cast %54 : vector<1x8x8xf32> to vector<8x8xf32>
    %56 = vector.extract_strided_slice %13 {offsets = [0, 16], sizes = [8, 8], strides = [1, 1]} : vector<8x32xf32> to vector<8x8xf32>
    %57 = vector.shape_cast %56 : vector<8x8xf32> to vector<1x8x8xf32>
    %58 = vector.extract_strided_slice %9 {offsets = [0, 16], sizes = [8, 8], strides = [1, 1]} : vector<8x32xf32> to vector<8x8xf32>
    %59 = vector.shape_cast %58 : vector<8x8xf32> to vector<1x8x8xf32>
    %60 = vector.extract_strided_slice %11 {offsets = [0, 16], sizes = [8, 8], strides = [1, 1]} : vector<8x32xf32> to vector<8x8xf32>
    %61 = vector.shape_cast %60 : vector<8x8xf32> to vector<1x8x8xf32>
    "tpu.trace_start"() <{level = 10 : i32, message = "bqe,bke->bqk"}> : () -> ()
    %cst_32 = arith.constant dense<0.000000e+00> : vector<1x8x8xf32>
    %62 = tpu.matmul %57, %59, %cst_32 {dimension_numbers = #tpu.dot_dimension_numbers<[2], [2], [1], [1], [0, 0, 0, 1, 1, 1], [0], [0]>} : vector<1x8x8xf32>, vector<1x8x8xf32>, vector<1x8x8xf32> -> vector<1x8x8xf32>
    "tpu.trace_stop"() : () -> ()
    %cst_33 = arith.constant dense<0xFF800000> : vector<1x8xf32>
    %63 = vector.multi_reduction <maximumf>, %62, %cst_33 [2] : vector<1x8x8xf32> to vector<1x8xf32>
    %64 = vector.shape_cast %63 : vector<1x8xf32> to vector<1x8x1xf32>
    %65 = vector.broadcast %64 : vector<1x8x1xf32> to vector<1x8x8xf32>
    %66 = arith.subf %62, %65 : vector<1x8x8xf32>
    %67 = math.exp %66 : vector<1x8x8xf32>
    %cst_34 = arith.constant dense<0.000000e+00> : vector<1x8xf32>
    %68 = vector.multi_reduction <add>, %67, %cst_34 [2] : vector<1x8x8xf32> to vector<1x8xf32>
    %69 = vector.shape_cast %68 : vector<1x8xf32> to vector<1x8x1xf32>
    %70 = vector.broadcast %69 : vector<1x8x1xf32> to vector<1x8x8xf32>
    %71 = arith.divf %67, %70 : vector<1x8x8xf32>
    %c0_35 = arith.constant 0 : index
    %c2 = arith.constant 2 : index
    %c0_36 = arith.constant 0 : index
    %c0_37 = arith.constant 0 : index
    %72 = vector.load %arg11[%c0_35, %c2, %c0_36, %c0_37] : memref<1x4x8x8xf32, #tpu.memory_space<vmem>>, vector<1x1x8x8xf32>
    %73 = vector.shape_cast %72 : vector<1x1x8x8xf32> to vector<1x8x8xf32>
    %74 = vector.shape_cast %71 : vector<1x8x8xf32> to vector<1x1x8x8xf32>
    tpu.vector_store %arg11[%c0_35, %c2, %c0_36, %c0_37], %74 {strides = array<i32>} : memref<1x4x8x8xf32, #tpu.memory_space<vmem>>, vector<1x1x8x8xf32>,
    "tpu.trace_start"() <{level = 10 : i32, message = "bqk,bke->bqe"}> : () -> ()
    %cst_38 = arith.constant dense<0.000000e+00> : vector<1x8x8xf32>
    %75 = tpu.matmul %71, %61, %cst_38 {dimension_numbers = #tpu.dot_dimension_numbers<[2], [1], [1], [2], [0, 0, 0, 1, 1, 2], [0], [0]>} : vector<1x8x8xf32>, vector<1x8x8xf32>, vector<1x8x8xf32> -> vector<1x8x8xf32>
    "tpu.trace_stop"() : () -> ()
    %76 = vector.shape_cast %75 : vector<1x8x8xf32> to vector<8x8xf32>
    %77 = vector.extract_strided_slice %13 {offsets = [0, 24], sizes = [8, 8], strides = [1, 1]} : vector<8x32xf32> to vector<8x8xf32>
    %78 = vector.shape_cast %77 : vector<8x8xf32> to vector<1x8x8xf32>
    %79 = vector.extract_strided_slice %9 {offsets = [0, 24], sizes = [8, 8], strides = [1, 1]} : vector<8x32xf32> to vector<8x8xf32>
    %80 = vector.shape_cast %79 : vector<8x8xf32> to vector<1x8x8xf32>
    %81 = vector.extract_strided_slice %11 {offsets = [0, 24], sizes = [8, 8], strides = [1, 1]} : vector<8x32xf32> to vector<8x8xf32>
    %82 = vector.shape_cast %81 : vector<8x8xf32> to vector<1x8x8xf32>
    "tpu.trace_start"() <{level = 10 : i32, message = "bqe,bke->bqk"}> : () -> ()
    %cst_39 = arith.constant dense<0.000000e+00> : vector<1x8x8xf32>
    %83 = tpu.matmul %78, %80, %cst_39 {dimension_numbers = #tpu.dot_dimension_numbers<[2], [2], [1], [1], [0, 0, 0, 1, 1, 1], [0], [0]>} : vector<1x8x8xf32>, vector<1x8x8xf32>, vector<1x8x8xf32> -> vector<1x8x8xf32>
    "tpu.trace_stop"() : () -> ()
    %cst_40 = arith.constant dense<0xFF800000> : vector<1x8xf32>
    %84 = vector.multi_reduction <maximumf>, %83, %cst_40 [2] : vector<1x8x8xf32> to vector<1x8xf32>
    %85 = vector.shape_cast %84 : vector<1x8xf32> to vector<1x8x1xf32>
    %86 = vector.broadcast %85 : vector<1x8x1xf32> to vector<1x8x8xf32>
    %87 = arith.subf %83, %86 : vector<1x8x8xf32>
    %88 = math.exp %87 : vector<1x8x8xf32>
    %cst_41 = arith.constant dense<0.000000e+00> : vector<1x8xf32>
    %89 = vector.multi_reduction <add>, %88, %cst_41 [2] : vector<1x8x8xf32> to vector<1x8xf32>
    %90 = vector.shape_cast %89 : vector<1x8xf32> to vector<1x8x1xf32>
    %91 = vector.broadcast %90 : vector<1x8x1xf32> to vector<1x8x8xf32>
    %92 = arith.divf %88, %91 : vector<1x8x8xf32>
    %c0_42 = arith.constant 0 : index
    %c3 = arith.constant 3 : index
    %c0_43 = arith.constant 0 : index
    %c0_44 = arith.constant 0 : index
    %93 = vector.load %arg11[%c0_42, %c3, %c0_43, %c0_44] : memref<1x4x8x8xf32, #tpu.memory_space<vmem>>, vector<1x1x8x8xf32>
    %94 = vector.shape_cast %93 : vector<1x1x8x8xf32> to vector<1x8x8xf32>
    %95 = vector.shape_cast %92 : vector<1x8x8xf32> to vector<1x1x8x8xf32>
    tpu.vector_store %arg11[%c0_42, %c3, %c0_43, %c0_44], %95 {strides = array<i32>} : memref<1x4x8x8xf32, #tpu.memory_space<vmem>>, vector<1x1x8x8xf32>,
    "tpu.trace_start"() <{level = 10 : i32, message = "bqk,bke->bqe"}> : () -> ()
    %cst_45 = arith.constant dense<0.000000e+00> : vector<1x8x8xf32>
    %96 = tpu.matmul %92, %82, %cst_45 {dimension_numbers = #tpu.dot_dimension_numbers<[2], [1], [1], [2], [0, 0, 0, 1, 1, 2], [0], [0]>} : vector<1x8x8xf32>, vector<1x8x8xf32>, vector<1x8x8xf32> -> vector<1x8x8xf32>
    "tpu.trace_stop"() : () -> ()
    %97 = vector.shape_cast %96 : vector<1x8x8xf32> to vector<8x8xf32>
    %98 = tpu.concatenate %34, %55, %76, %97 in 1 : vector<8x8xf32>, vector<8x8xf32>, vector<8x8xf32>, vector<8x8xf32> -> vector<8x32xf32>
    %c0_46 = arith.constant 0 : index
    %c0_47 = arith.constant 0 : index
    %99 = vector.load %arg7[%c0_46, %c0_47] : memref<32x32xf32, #tpu.memory_space<vmem>>, vector<32x32xf32>
    %cst_48 = arith.constant dense<0.000000e+00> : vector<8x32xf32>
    %100 = tpu.matmul %98, %99, %cst_48 {dimension_numbers = #tpu.dot_dimension_numbers<[1], [0], [0], [1], [0, 0, 1, 1], [], []>} : vector<8x32xf32>, vector<32x32xf32>, vector<8x32xf32> -> vector<8x32xf32>
    %101 = arith.addf %100, %1 : vector<8x32xf32>
    %cst_49 = arith.constant dense<0.000000e+00> : vector<8xf32>
    %102 = vector.multi_reduction <add>, %101, %cst_49 [1] : vector<8x32xf32> to vector<8xf32>
    %103 = vector.shape_cast %102 : vector<8xf32> to vector<8x1xf32>
    %cst_50 = arith.constant 3.200000e+01 : f32
    %104 = vector.broadcast %cst_50 : f32 to vector<8x1xf32>
    %105 = arith.divf %103, %104 : vector<8x1xf32>
    %106 = vector.broadcast %105 : vector<8x1xf32> to vector<8x32xf32>
    %107 = arith.subf %101, %106 : vector<8x32xf32>
    %108 = arith.mulf %107, %107 : vector<8x32xf32>
    %cst_51 = arith.constant dense<0.000000e+00> : vector<8xf32>
    %109 = vector.multi_reduction <add>, %108, %cst_51 [1] : vector<8x32xf32> to vector<8xf32>
    %110 = vector.shape_cast %109 : vector<8xf32> to vector<8x1xf32>
    %cst_52 = arith.constant 3.200000e+01 : f32
    %111 = vector.broadcast %cst_52 : f32 to vector<8x1xf32>
    %112 = arith.divf %110, %111 : vector<8x1xf32>
    %113 = vector.broadcast %105 : vector<8x1xf32> to vector<8x32xf32>
    %114 = arith.subf %101, %113 : vector<8x32xf32>
    %cst_53 = arith.constant 9.99999997E-7 : f32
    %115 = vector.broadcast %cst_53 : f32 to vector<8x1xf32>
    %116 = arith.addf %112, %115 : vector<8x1xf32>
    %117 = math.rsqrt %116 : vector<8x1xf32>
    %118 = vector.broadcast %117 : vector<8x1xf32> to vector<8x32xf32>
    %119 = arith.mulf %114, %118 : vector<8x32xf32>
    %c0_54 = arith.constant 0 : index
    %c0_55 = arith.constant 0 : index
    %120 = vector.load %arg8[%c0_54, %c0_55] : memref<1x32xf32, #tpu.memory_space<vmem>>, vector<1x32xf32>
    %121 = vector.broadcast %120 : vector<1x32xf32> to vector<8x32xf32>
    %122 = arith.mulf %119, %121 : vector<8x32xf32>
    %c0_56 = arith.constant 0 : index
    %c0_57 = arith.constant 0 : index
    %123 = vector.load %arg9[%c0_56, %c0_57] : memref<1x32xf32, #tpu.memory_space<vmem>>, vector<1x32xf32>
    %124 = vector.broadcast %123 : vector<1x32xf32> to vector<8x32xf32>
    %125 = arith.addf %122, %124 : vector<8x32xf32>
    %126 = vector.shape_cast %125 : vector<8x32xf32> to vector<1x8x32xf32>
    %c0_58 = arith.constant 0 : index
    %c0_59 = arith.constant 0 : index
    %c0_60 = arith.constant 0 : index
    %127 = vector.load %arg10[%c0_58, %c0_59, %c0_60] : memref<1x8x32xf32, #tpu.memory_space<vmem>>, vector<1x8x32xf32>
    tpu.vector_store %arg10[%c0_58, %c0_59, %c0_60], %126 {strides = array<i32>} : memref<1x8x32xf32, #tpu.memory_space<vmem>>, vector<1x8x32xf32>,
    return
  }
  func.func @transform_0(%arg0: i32) -> (i32, i32, i32) {
    %c0_i32 = arith.constant 0 : i32
    %c0_i32_0 = arith.constant 0 : i32
    %c0_i32_1 = arith.constant 0 : i32
    return %arg0, %c0_i32, %c0_i32_0 : i32, i32, i32
  }
  func.func @transform_1(%arg0: i32) -> (i32, i32, i32) {
    %c0_i32 = arith.constant 0 : i32
    %c0_i32_0 = arith.constant 0 : i32
    %c0_i32_1 = arith.constant 0 : i32
    return %arg0, %c0_i32, %c0_i32_0 : i32, i32, i32
  }
  func.func @transform_2(%arg0: i32) -> (i32, i32, i32) {
    %c0_i32 = arith.constant 0 : i32
    %c0_i32_0 = arith.constant 0 : i32
    %c0_i32_1 = arith.constant 0 : i32
    return %arg0, %c0_i32, %c0_i32_0 : i32, i32, i32
  }
  func.func @transform_3(%arg0: i32) -> (i32, i32) {
    %c0_i32 = arith.constant 0 : i32
    %c0_i32_0 = arith.constant 0 : i32
    %c0_i32_1 = arith.constant 0 : i32
    return %c0_i32, %c0_i32_0 : i32, i32
  }
  func.func @transform_4(%arg0: i32) -> (i32, i32) {
    %c0_i32 = arith.constant 0 : i32
    %c0_i32_0 = arith.constant 0 : i32
    %c0_i32_1 = arith.constant 0 : i32
    return %c0_i32, %c0_i32_0 : i32, i32
  }
  func.func @transform_5(%arg0: i32) -> (i32, i32) {
    %c0_i32 = arith.constant 0 : i32
    %c0_i32_0 = arith.constant 0 : i32
    %c0_i32_1 = arith.constant 0 : i32
    return %c0_i32, %c0_i32_0 : i32, i32
  }
  func.func @transform_6(%arg0: i32) -> (i32, i32) {
    %c0_i32 = arith.constant 0 : i32
    %c0_i32_0 = arith.constant 0 : i32
    %c0_i32_1 = arith.constant 0 : i32
    return %c0_i32, %c0_i32_0 : i32, i32
  }
  func.func @transform_7(%arg0: i32) -> (i32, i32) {
    %c0_i32 = arith.constant 0 : i32
    %c0_i32_0 = arith.constant 0 : i32
    %c0_i32_1 = arith.constant 0 : i32
    return %c0_i32, %c0_i32_0 : i32, i32
  }
  func.func @transform_8(%arg0: i32) -> (i32, i32) {
    %c0_i32 = arith.constant 0 : i32
    %c0_i32_0 = arith.constant 0 : i32
    %c0_i32_1 = arith.constant 0 : i32
    return %c0_i32, %c0_i32_0 : i32, i32
  }
  func.func @transform_9(%arg0: i32) -> (i32, i32, i32) {
    %c0_i32 = arith.constant 0 : i32
    %c0_i32_0 = arith.constant 0 : i32
    %c0_i32_1 = arith.constant 0 : i32
    return %arg0, %c0_i32, %c0_i32_0 : i32, i32, i32
  }
  func.func @transform_10(%arg0: i32) -> (i32, i32, i32, i32) {
    %c0_i32 = arith.constant 0 : i32
    %c0_i32_0 = arith.constant 0 : i32
    %c0_i32_1 = arith.constant 0 : i32
    %c0_i32_2 = arith.constant 0 : i32
    return %arg0, %c0_i32, %c0_i32_0, %c0_i32_1 : i32, i32, i32, i32
  }
}

</mosaic_0001>

<llo_original>
// kernel: tpu_custom_call.1
$region0: #{tpu_custom_call.1}
  #allocation0 [shape = 'u32[]', space=smem, size = 0x4, offset = 0x4, fixed_abs, tag = 'smem constant byte address 0x4 - core index']
  #allocation1 [shape = 'u32[72,128]{1,0:T(1,128)}', space=vmem, size = 0x9000, scoped, tag = 'internal scratch']
  %s0 = inlined_call_operand.hbm [shape: f32[2,8,32], index: 0, kind: input, shape index: {}]
  %s1 = inlined_call_operand.hbm [shape: f32[2,8,32], index: 1, kind: input, shape index: {}]
  %s2 = inlined_call_operand.hbm [shape: f32[2,8,32], index: 2, kind: input, shape index: {}]
  %s3 = inlined_call_operand.hbm [shape: f32[32,32], index: 3, kind: input, shape index: {}]
  %s4 = inlined_call_operand.hbm [shape: f32[32,32], index: 4, kind: input, shape index: {}]
  %s5 = inlined_call_operand.hbm [shape: f32[32,32], index: 5, kind: input, shape index: {}]
  %s6 = inlined_call_operand.hbm [shape: f32[32,32], index: 6, kind: input, shape index: {}]
  %s7 = inlined_call_operand.vmem [shape: f32[1,32], index: 7, kind: input, shape index: {}]
  %s8 = inlined_call_operand.vmem [shape: f32[1,32], index: 8, kind: input, shape index: {}]
  %s9 = inlined_call_operand.hbm [shape: f32[2,8,32], index: 9, kind: output, shape index: {0}]
  %s10 = inlined_call_operand.hbm [shape: f32[2,4,8,8], index: 10, kind: output, shape index: {1}]
  %11 = xla_tuple %s9, %s10
  %s12 = sld [smem:[#allocation0]]
  $region105: #{tpu_custom_call.1} parent=0
    _
  %s14 = ssub.s32 1, %s12
  %s15 = scalar_select 0, %s14, %s12
  $region1: #{tpu_custom_call.1} parent=0
    #allocation2 [shape = 'u8[8192]{0}', space=vmem, size = 0x2000, scoped, tag = 'input window, operand 0']
    #allocation3 [shape = 's32[2]{0}', space=sflag, size = 0x8, scoped, tag = 'scoped memory for tpu_custom_call.1']
    #allocation4 [shape = 's32[2]{0}', space=sflag, size = 0x8, scoped, tag = 'scoped memory for tpu_custom_call.1']
    #allocation5 [shape = 'u8[8192]{0}', space=vmem, size = 0x2000, scoped, tag = 'input window, operand 1']
    #allocation6 [shape = 's32[2]{0}', space=sflag, size = 0x8, scoped, tag = 'scoped memory for tpu_custom_call.1']
    #allocation7 [shape = 'u8[8192]{0}', space=vmem, size = 0x2000, scoped, tag = 'input window, operand 2']
    #allocation8 [shape = 'u8[16384]{0}', space=vmem, size = 0x4000, scoped, tag = 'input window, operand 3, single buffered']
    #allocation9 [shape = 's32[1]{0}', space=sflag, size = 0x4, scoped, tag = 'scoped memory for tpu_custom_call.1']
    #allocation10 [shape = 'u8[16384]{0}', space=vmem, size = 0x4000, scoped, tag = 'input window, operand 4, single buffered']
    #allocation11 [shape = 'u8[16384]{0}', space=vmem, size = 0x4000, scoped, tag = 'input window, operand 5, single buffered']
    #allocation12 [shape = 's32[1]{0}', space=sflag, size = 0x4, scoped, tag = 'scoped memory for tpu_custom_call.1']
    #allocation13 [shape = 'u8[16384]{0}', space=vmem, size = 0x4000, scoped, tag = 'input window, operand 6, single buffered']
    #allocation14 [shape = 'u8[8192]{0}', space=vmem, size = 0x2000, scoped, tag = 'output window, operand 0']
    #allocation15 [shape = 'u8[32768]{0}', space=vmem, size = 0x8000, scoped, tag = 'output window, operand 1']
    #allocation16 [shape = 's32[2]{0}', space=sflag, size = 0x8, scoped, tag = 'scoped memory for tpu_custom_call.1']
    %16 = vsyncpa [#allocation3], 0
    %s17 = scalar_lea.sflag [#allocation3], 1
    %18 = vsyncpa %s17, 0
    %19 = vsyncpa [#allocation6], 0
    %s20 = scalar_lea.sflag [#allocation6], 1
    %21 = vsyncpa %s20, 0
    %22 = vsyncpa [#allocation9], 0
    %23 = vsyncpa [#allocation12], 0
    %24 = vsyncpa [#allocation4], 0
    %s25 = scalar_lea.sflag [#allocation4], 1
    %26 = vsyncpa %s25, 0
    %27 = vsyncpa [#allocation16], 0
    %s28 = scalar_lea.sflag [#allocation16], 1
    %29 = vsyncpa %s28, 0
    loop: start=0, step=1, limit=4
    $region2: #{tpu_custom_call.1} parent=1 // loop_pre_header
      _
    $region3: #{tpu_custom_call.1} parent=1 // loop_header
      %s31 = sphi 0, %s35
      %p32 = scmp.ge.s32.totalorder %s31, 4
      %s41 = sphi 0, %s43
      %s44 = sphi 0, %s41
      %s45 = sphi 0, %s44
      %s61 = sphi 0, %s45
      %s67 = sphi 0, %s69
      %s70 = sphi 0, %s67
      %s71 = sphi 0, %s70
      %s87 = sphi 0, %s71
      %s93 = sphi 0, %s95
      %s96 = sphi 0, %s93
      %s97 = sphi 0, %s96
      %s113 = sphi 0, %s97
      %s117 = sphi 0, %s117
      %s119 = sphi 0, %s117
      %s120 = sphi 0, %s119
      %s134 = sphi 0, %s120
      %s138 = sphi 0, %s138
      %s140 = sphi 0, %s138
      %s141 = sphi 0, %s140
      %s155 = sphi 0, %s141
      %s159 = sphi 0, %s159
      %s161 = sphi 0, %s159
      %s162 = sphi 0, %s161
      %s176 = sphi 0, %s162
      %s180 = sphi 0, %s180
      %s182 = sphi 0, %s180
      %s183 = sphi 0, %s182
      %s197 = sphi 0, %s183
      %s201 = sphi 0, %s201
      %s203 = sphi 0, %s201
      %s204 = sphi 0, %s203
      %s218 = sphi 0, %s204
      %s222 = sphi 0, %s222
      %s224 = sphi 0, %s222
      %s225 = sphi 0, %s224
      %s239 = sphi 0, %s225
      %s245 = sphi 0, %s247
      %s248 = sphi 0, %s245
      %s249 = sphi 0, %s248
      %s265 = sphi 0, %s249
      %s271 = sphi 0, %s273
      %s274 = sphi 0, %s271
      %s275 = sphi 0, %s274
      %s291 = sphi 0, %s275
    $region4: #{tpu_custom_call.1} parent=1 // loop_header_branch
      %34 = sbr.rel (%p32) target = $region8
    $region5: #{tpu_custom_call.1} parent=1 // loop_body
      %s36 = ssub.s32 %s31, 1
      %s37 = ssub.s32 %s31, 2
      %s38 = sadd.s32 %s31, 1
      %s39 = ssub.s32 %s31, %s38
      %p40 = scmp.eq.s32.totalorder %s39, 0
      %s42 = sadd.s32 %s41, 1
      %s43 = scalar_select %p40, %s41, %s42
      %p46 = pneg %p40
      %p47 = scmp.eq.s32.totalorder %s31, 1
      %p48 = por %p46, %p47
      %p49 = scmp.ne.s32.totalorder %s41, %s44
      %p50 = scmp.eq.s32.totalorder %s31, 0
      %p51 = por %p49, %p50
      %p52 = scmp.ne.s32.totalorder %s41, %s44
      %p53 = scmp.eq.s32.totalorder %s36, 1
      %p54 = por %p52, %p53
      %p55 = scmp.ne.s32.totalorder %s44, %s45
      %p56 = scmp.eq.s32.totalorder %s36, 0
      %p57 = por %p55, %p56
      %p58 = scmp.ne.s32.totalorder %s44, %s45
      %p59 = scmp.eq.s32.totalorder %s37, 1
      %p60 = por %p58, %p59
      %p62 = scmp.ne.s32.totalorder %s45, %s61
      %p63 = scmp.eq.s32.totalorder %s37, 0
      %p64 = por %p62, %p63
      %s65 = ssub.s32 %s31, %s38
      %p66 = scmp.eq.s32.totalorder %s65, 0
      %s68 = sadd.s32 %s67, 1
      %s69 = scalar_select %p66, %s67, %s68
      %p72 = pneg %p66
      %p73 = scmp.eq.s32.totalorder %s31, 1
      %p74 = por %p72, %p73
      %p75 = scmp.ne.s32.totalorder %s67, %s70
      %p76 = scmp.eq.s32.totalorder %s31, 0
      %p77 = por %p75, %p76
      %p78 = scmp.ne.s32.totalorder %s67, %s70
      %p79 = scmp.eq.s32.totalorder %s36, 1
      %p80 = por %p78, %p79
      %p81 = scmp.ne.s32.totalorder %s70, %s71
      %p82 = scmp.eq.s32.totalorder %s36, 0
      %p83 = por %p81, %p82
      %p84 = scmp.ne.s32.totalorder %s70, %s71
      %p85 = scmp.eq.s32.totalorder %s37, 1
      %p86 = por %p84, %p85
      %p88 = scmp.ne.s32.totalorder %s71, %s87
      %p89 = scmp.eq.s32.totalorder %s37, 0
      %p90 = por %p88, %p89
      %s91 = ssub.s32 %s31, %s38
      %p92 = scmp.eq.s32.totalorder %s91, 0
      %s94 = sadd.s32 %s93, 1
      %s95 = scalar_select %p92, %s93, %s94
      %p98 = pneg %p92
      %p99 = scmp.eq.s32.totalorder %s31, 1
      %p100 = por %p98, %p99
      %p101 = scmp.ne.s32.totalorder %s93, %s96
      %p102 = scmp.eq.s32.totalorder %s31, 0
      %p103 = por %p101, %p102
      %p104 = scmp.ne.s32.totalorder %s93, %s96
      %p105 = scmp.eq.s32.totalorder %s36, 1
      %p106 = por %p104, %p105
      %p107 = scmp.ne.s32.totalorder %s96, %s97
      %p108 = scmp.eq.s32.totalorder %s36, 0
      %p109 = por %p107, %p108
      %p110 = scmp.ne.s32.totalorder %s96, %s97
      %p111 = scmp.eq.s32.totalorder %s37, 1
      %p112 = por %p110, %p111
      %p114 = scmp.ne.s32.totalorder %s97, %s113
      %p115 = scmp.eq.s32.totalorder %s37, 0
      %p116 = por %p114, %p115
      %s118 = sadd.s32 %s117, 1
      %p121 = scmp.eq.s32.totalorder %s31, 1
      %p122 = scmp.ne.s32.totalorder %s117, %s119
      %p123 = scmp.eq.s32.totalorder %s31, 0
      %p124 = por %p122, %p123
      %p125 = scmp.ne.s32.totalorder %s117, %s119
      %p126 = scmp.eq.s32.totalorder %s36, 1
      %p127 = por %p125, %p126
      %p128 = scmp.ne.s32.totalorder %s119, %s120
      %p129 = scmp.eq.s32.totalorder %s36, 0
      %p130 = por %p128, %p129
      %p131 = scmp.ne.s32.totalorder %s119, %s120
      %p132 = scmp.eq.s32.totalorder %s37, 1
      %p133 = por %p131, %p132
      %p135 = scmp.ne.s32.totalorder %s120, %s134
      %p136 = scmp.eq.s32.totalorder %s37, 0
      %p137 = por %p135, %p136
      %s139 = sadd.s32 %s138, 1
      %p142 = scmp.eq.s32.totalorder %s31, 1
      %p143 = scmp.ne.s32.totalorder %s138, %s140
      %p144 = scmp.eq.s32.totalorder %s31, 0
      %p145 = por %p143, %p144
      %p146 = scmp.ne.s32.totalorder %s138, %s140
      %p147 = scmp.eq.s32.totalorder %s36, 1
      %p148 = por %p146, %p147
      %p149 = scmp.ne.s32.totalorder %s140, %s141
      %p150 = scmp.eq.s32.totalorder %s36, 0
      %p151 = por %p149, %p150
      %p152 = scmp.ne.s32.totalorder %s140, %s141
      %p153 = scmp.eq.s32.totalorder %s37, 1
      %p154 = por %p152, %p153
      %p156 = scmp.ne.s32.totalorder %s141, %s155
      %p157 = scmp.eq.s32.totalorder %s37, 0
      %p158 = por %p156, %p157
      %s160 = sadd.s32 %s159, 1
      %p163 = scmp.eq.s32.totalorder %s31, 1
      %p164 = scmp.ne.s32.totalorder %s159, %s161
      %p165 = scmp.eq.s32.totalorder %s31, 0
      %p166 = por %p164, %p165
      %p167 = scmp.ne.s32.totalorder %s159, %s161
      %p168 = scmp.eq.s32.totalorder %s36, 1
      %p169 = por %p167, %p168
      %p170 = scmp.ne.s32.totalorder %s161, %s162
      %p171 = scmp.eq.s32.totalorder %s36, 0
      %p172 = por %p170, %p171
      %p173 = scmp.ne.s32.totalorder %s161, %s162
      %p174 = scmp.eq.s32.totalorder %s37, 1
      %p175 = por %p173, %p174
      %p177 = scmp.ne.s32.totalorder %s162, %s176
      %p178 = scmp.eq.s32.totalorder %s37, 0
      %p179 = por %p177, %p178
      %s181 = sadd.s32 %s180, 1
      %p184 = scmp.eq.s32.totalorder %s31, 1
      %p185 = scmp.ne.s32.totalorder %s180, %s182
      %p186 = scmp.eq.s32.totalorder %s31, 0
      %p187 = por %p185, %p186
      %p188 = scmp.ne.s32.totalorder %s180, %s182
      %p189 = scmp.eq.s32.totalorder %s36, 1
      %p190 = por %p188, %p189
      %p191 = scmp.ne.s32.totalorder %s182, %s183
      %p192 = scmp.eq.s32.totalorder %s36, 0
      %p193 = por %p191, %p192
      %p194 = scmp.ne.s32.totalorder %s182, %s183
      %p195 = scmp.eq.s32.totalorder %s37, 1
      %p196 = por %p194, %p195
      %p198 = scmp.ne.s32.totalorder %s183, %s197
      %p199 = scmp.eq.s32.totalorder %s37, 0
      %p200 = por %p198, %p199
      %s202 = sadd.s32 %s201, 1
      %p205 = scmp.eq.s32.totalorder %s31, 1
      %p206 = scmp.ne.s32.totalorder %s201, %s203
      %p207 = scmp.eq.s32.totalorder %s31, 0
      %p208 = por %p206, %p207
      %p209 = scmp.ne.s32.totalorder %s201, %s203
      %p210 = scmp.eq.s32.totalorder %s36, 1
      %p211 = por %p209, %p210
      %p212 = scmp.ne.s32.totalorder %s203, %s204
      %p213 = scmp.eq.s32.totalorder %s36, 0
      %p214 = por %p212, %p213
      %p215 = scmp.ne.s32.totalorder %s203, %s204
      %p216 = scmp.eq.s32.totalorder %s37, 1
      %p217 = por %p215, %p216
      %p219 = scmp.ne.s32.totalorder %s204, %s218
      %p220 = scmp.eq.s32.totalorder %s37, 0
      %p221 = por %p219, %p220
      %s223 = sadd.s32 %s222, 1
      %p226 = scmp.eq.s32.totalorder %s31, 1
      %p227 = scmp.ne.s32.totalorder %s222, %s224
      %p228 = scmp.eq.s32.totalorder %s31, 0
      %p229 = por %p227, %p228
      %p230 = scmp.ne.s32.totalorder %s222, %s224
      %p231 = scmp.eq.s32.totalorder %s36, 1
      %p232 = por %p230, %p231
      %p233 = scmp.ne.s32.totalorder %s224, %s225
      %p234 = scmp.eq.s32.totalorder %s36, 0
      %p235 = por %p233, %p234
      %p236 = scmp.ne.s32.totalorder %s224, %s225
      %p237 = scmp.eq.s32.totalorder %s37, 1
      %p238 = por %p236, %p237
      %p240 = scmp.ne.s32.totalorder %s225, %s239
      %p241 = scmp.eq.s32.totalorder %s37, 0
      %p242 = por %p240, %p241
      %s243 = ssub.s32 %s31, %s38
      %p244 = scmp.eq.s32.totalorder %s243, 0
      %s246 = sadd.s32 %s245, 1
      %s247 = scalar_select %p244, %s245, %s246
      %p250 = pneg %p244
      %p251 = scmp.eq.s32.totalorder %s31, 1
      %p252 = por %p250, %p251
      %p253 = scmp.ne.s32.totalorder %s245, %s248
      %p254 = scmp.eq.s32.totalorder %s31, 0
      %p255 = por %p253, %p254
      %p256 = scmp.ne.s32.totalorder %s245, %s248
      %p257 = scmp.eq.s32.totalorder %s36, 1
      %p258 = por %p256, %p257
      %p259 = scmp.ne.s32.totalorder %s248, %s249
      %p260 = scmp.eq.s32.totalorder %s36, 0
      %p261 = por %p259, %p260
      %p262 = scmp.ne.s32.totalorder %s248, %s249
      %p263 = scmp.eq.s32.totalorder %s37, 1
      %p264 = por %p262, %p263
      %p266 = scmp.ne.s32.totalorder %s249, %s265
      %p267 = scmp.eq.s32.totalorder %s37, 0
      %p268 = por %p266, %p267
      %s269 = ssub.s32 %s31, %s38
      %p270 = scmp.eq.s32.totalorder %s269, 0
      %s272 = sadd.s32 %s271, 1
      %s273 = scalar_select %p270, %s271, %s272
      %p276 = pneg %p270
      %p277 = scmp.eq.s32.totalorder %s31, 1
      %p278 = por %p276, %p277
      %p279 = scmp.ne.s32.totalorder %s271, %s274
      %p280 = scmp.eq.s32.totalorder %s31, 0
      %p281 = por %p279, %p280
      %p282 = scmp.ne.s32.totalorder %s271, %s274
      %p283 = scmp.eq.s32.totalorder %s36, 1
      %p284 = por %p282, %p283
      %p285 = scmp.ne.s32.totalorder %s274, %s275
      %p286 = scmp.eq.s32.totalorder %s36, 0
      %p287 = por %p285, %p286
      %p288 = scmp.ne.s32.totalorder %s274, %s275
      %p289 = scmp.eq.s32.totalorder %s37, 1
      %p290 = por %p288, %p289
      %p292 = scmp.ne.s32.totalorder %s275, %s291
      %p293 = scmp.eq.s32.totalorder %s37, 0
      %p294 = por %p292, %p293
      %p295 = scmp.le.s32.totalorder 1, %s31
      %p296 = scmp.lt.s32.totalorder %s31, 3
      %p297 = pnand %p295, %p296
      %p298 = pneg %p297
      // Predicated region
      $region9: #{tpu_custom_call.1} parent=5 // pred_check
        _
      $region10: #{tpu_custom_call.1} parent=5 // pred_check_branch
        %300 = sbr.rel (%p297) target = $region12
      $region11: #{tpu_custom_call.1} parent=5 // pred_region
        %s301 = ssub.s32 %s31, 1
        // Predicated region
        $region13: #{tpu_custom_call.1} parent=11 // pred_check
          %p302 = pneg %p130
        $region14: #{tpu_custom_call.1} parent=11 // pred_check_branch
          %304 = sbr.rel (%p302) target = $region16
        $region15: #{tpu_custom_call.1} parent=11 // pred_region
          %306 = vsyncadd [#allocation9], 0
          %s307 = sshll.u32 %s3, 4
          %s308 = int_to_ptr.hbm [resolvable:$true] %s307
          %s309 = sshll.u32 [#allocation8], 4
          %s310 = int_to_ptr.vmem [resolvable:$true] %s309
          %315 = dma.hbm_to_vmem [thread:$0]  %s308, 512, %s310, [#allocation9], 128, 128, 8
        $region16: #{tpu_custom_call.1} parent=11 // pred_fallthru
          _
        // Predicated region
        $region17: #{tpu_custom_call.1} parent=11 // pred_check
          %p316 = pneg %p151
        $region18: #{tpu_custom_call.1} parent=11 // pred_check_branch
          %318 = sbr.rel (%p316) target = $region20
        $region19: #{tpu_custom_call.1} parent=11 // pred_region
          %320 = vsyncadd [#allocation9], 0
          %s321 = sshll.u32 %s4, 4
          %s322 = int_to_ptr.hbm [resolvable:$true] %s321
          %s323 = sshll.u32 [#allocation10], 4
          %s324 = int_to_ptr.vmem [resolvable:$true] %s323
          %329 = dma.hbm_to_vmem [thread:$0]  %s322, 512, %s324, [#allocation9], 128, 128, 8
        $region20: #{tpu_custom_call.1} parent=11 // pred_fallthru
          _
        // Predicated region
        $region21: #{tpu_custom_call.1} parent=11 // pred_check
          %p330 = pneg %p172
        $region22: #{tpu_custom_call.1} parent=11 // pred_check_branch
          %332 = sbr.rel (%p330) target = $region24
        $region23: #{tpu_custom_call.1} parent=11 // pred_region
          %334 = vsyncadd [#allocation12], 0
          %s335 = sshll.u32 %s5, 4
          %s336 = int_to_ptr.hbm [resolvable:$true] %s335
          %s337 = sshll.u32 [#allocation11], 4
          %s338 = int_to_ptr.vmem [resolvable:$true] %s337
          %343 = dma.hbm_to_vmem [thread:$0]  %s336, 512, %s338, [#allocation12], 128, 128, 8
        $region24: #{tpu_custom_call.1} parent=11 // pred_fallthru
          _
        // Predicated region
        $region25: #{tpu_custom_call.1} parent=11 // pred_check
          %p344 = pneg %p193
        $region26: #{tpu_custom_call.1} parent=11 // pred_check_branch
          %346 = sbr.rel (%p344) target = $region28
        $region27: #{tpu_custom_call.1} parent=11 // pred_region
          %348 = vsyncadd [#allocation12], 0
          %s349 = sshll.u32 %s6, 4
          %s350 = int_to_ptr.hbm [resolvable:$true] %s349
          %s351 = sshll.u32 [#allocation13], 4
          %s352 = int_to_ptr.vmem [resolvable:$true] %s351
          %357 = dma.hbm_to_vmem [thread:$0]  %s350, 512, %s352, [#allocation12], 128, 128, 8
        $region28: #{tpu_custom_call.1} parent=11 // pred_fallthru
          _
        // Predicated region
        $region29: #{tpu_custom_call.1} parent=11 // pred_check
          %p358 = pneg %p214
        $region30: #{tpu_custom_call.1} parent=11 // pred_check_branch
          %360 = sbr.rel (%p358) target = $region32
        $region31: #{tpu_custom_call.1} parent=11 // pred_region
          _
        $region32: #{tpu_custom_call.1} parent=11 // pred_fallthru
          _
        // Predicated region
        $region33: #{tpu_custom_call.1} parent=11 // pred_check
          %p361 = pneg %p235
        $region34: #{tpu_custom_call.1} parent=11 // pred_check_branch
          %363 = sbr.rel (%p361) target = $region36
        $region35: #{tpu_custom_call.1} parent=11 // pred_region
          _
        $region36: #{tpu_custom_call.1} parent=11 // pred_fallthru
          _
      $region12: #{tpu_custom_call.1} parent=5 // pred_fallthru
        _
      %p364 = scmp.lt.s32.totalorder %s31, 2
      // Predicated region
      $region37: #{tpu_custom_call.1} parent=5 // pred_check
        %p365 = pneg %p364
      $region38: #{tpu_custom_call.1} parent=5 // pred_check_branch
        %367 = sbr.rel (%p365) target = $region40
      $region39: #{tpu_custom_call.1} parent=5 // pred_region
        // Predicated region
        $region41: #{tpu_custom_call.1} parent=39 // pred_check
          %p368 = pneg %p51
        $region42: #{tpu_custom_call.1} parent=39 // pred_check_branch
          %370 = sbr.rel (%p368) target = $region44
        $region43: #{tpu_custom_call.1} parent=39 // pred_region
          %s371 = sand.u32 %s41, 1
          %s372 = scalar_lea.sflag [#allocation3], %s371
          %s373 = sand.u32 %s41, 1
          %s374 = smul.addr %s373, 8
          %s375 = scalar_lea.vmem [#allocation2], %s374
          %377 = vsyncadd %s372, 0
          %s378 = smul.addr %s31, 8
          %s379 = scalar_lea.hbm %s0, %s378
          %s381 = sshll.u32 %s379, 4
          %s382 = int_to_ptr.hbm [resolvable:$true] %s381
          %s383 = sshll.u32 %s375, 4
          %s384 = int_to_ptr.vmem [resolvable:$true] %s383
          %386 = dma.hbm_to_vmem [thread:$0]  %s382, 128, %s384, %s372
        $region44: #{tpu_custom_call.1} parent=39 // pred_fallthru
          _
        // Predicated region
        $region45: #{tpu_custom_call.1} parent=39 // pred_check
          %p387 = pneg %p77
        $region46: #{tpu_custom_call.1} parent=39 // pred_check_branch
          %389 = sbr.rel (%p387) target = $region48
        $region47: #{tpu_custom_call.1} parent=39 // pred_region
          %s390 = sand.u32 %s31, 1
          %s391 = scalar_lea.sflag [#allocation6], %s390
          %s392 = sand.u32 %s67, 1
          %s393 = smul.addr %s392, 8
          %s394 = scalar_lea.vmem [#allocation5], %s393
          %396 = vsyncadd %s391, 0
          %s397 = smul.addr %s31, 8
          %s398 = scalar_lea.hbm %s1, %s397
          %s400 = sshll.u32 %s398, 4
          %s401 = int_to_ptr.hbm [resolvable:$true] %s400
          %s402 = sshll.u32 %s394, 4
          %s403 = int_to_ptr.vmem [resolvable:$true] %s402
          %405 = dma.hbm_to_vmem [thread:$0]  %s401, 128, %s403, %s391
        $region48: #{tpu_custom_call.1} parent=39 // pred_fallthru
          _
        // Predicated region
        $region49: #{tpu_custom_call.1} parent=39 // pred_check
          %p406 = pneg %p103
        $region50: #{tpu_custom_call.1} parent=39 // pred_check_branch
          %408 = sbr.rel (%p406) target = $region52
        $region51: #{tpu_custom_call.1} parent=39 // pred_region
          %s409 = sand.u32 %s31, 1
          %s410 = scalar_lea.sflag [#allocation6], %s409
          %s411 = sand.u32 %s93, 1
          %s412 = smul.addr %s411, 8
          %s413 = scalar_lea.vmem [#allocation7], %s412
          %415 = vsyncadd %s410, 0
          %s416 = smul.addr %s31, 8
          %s417 = scalar_lea.hbm %s2, %s416
          %s419 = sshll.u32 %s417, 4
          %s420 = int_to_ptr.hbm [resolvable:$true] %s419
          %s421 = sshll.u32 %s413, 4
          %s422 = int_to_ptr.vmem [resolvable:$true] %s421
          %424 = dma.hbm_to_vmem [thread:$0]  %s420, 128, %s422, %s410
        $region52: #{tpu_custom_call.1} parent=39 // pred_fallthru
          _
      $region40: #{tpu_custom_call.1} parent=5 // pred_fallthru
        _
      %p425 = scmp.le.s32.totalorder 1, %s31
      %p426 = scmp.lt.s32.totalorder %s31, 3
      %p427 = pnand %p425, %p426
      %p428 = pneg %p427
      // Predicated region
      $region53: #{tpu_custom_call.1} parent=5 // pred_check
        _
      $region54: #{tpu_custom_call.1} parent=5 // pred_check_branch
        %430 = sbr.rel (%p427) target = $region56
      $region55: #{tpu_custom_call.1} parent=5 // pred_region
        %s431 = ssub.s32 %s31, 1
        %s432 = sand.u32 %s44, 1
        %s433 = scalar_lea.sflag [#allocation3], %s432
        %s434 = sand.u32 %s44, 1
        %s435 = smul.addr %s434, 8
        %s436 = scalar_lea.vmem [#allocation2], %s435
        // Predicated region
        $region57: #{tpu_custom_call.1} parent=55 // pred_check
          %p437 = pneg %p57
        $region58: #{tpu_custom_call.1} parent=55 // pred_check_branch
          %439 = sbr.rel (%p437) target = $region60
        $region59: #{tpu_custom_call.1} parent=55 // pred_region
          %441 = dma.done %s433, 128
        $region60: #{tpu_custom_call.1} parent=55 // pred_fallthru
          _
        %s442 = sand.u32 %s36, 1
        %s443 = scalar_lea.sflag [#allocation6], %s442
        %s444 = sand.u32 %s70, 1
        %s445 = smul.addr %s444, 8
        %s446 = scalar_lea.vmem [#allocation5], %s445
        // Predicated region
        $region61: #{tpu_custom_call.1} parent=55 // pred_check
          %p447 = pneg %p83
        $region62: #{tpu_custom_call.1} parent=55 // pred_check_branch
          %449 = sbr.rel (%p447) target = $region64
        $region63: #{tpu_custom_call.1} parent=55 // pred_region
          %451 = dma.done %s443, 128
        $region64: #{tpu_custom_call.1} parent=55 // pred_fallthru
          _
        %s452 = sand.u32 %s36, 1
        %s453 = scalar_lea.sflag [#allocation6], %s452
        %s454 = sand.u32 %s96, 1
        %s455 = smul.addr %s454, 8
        %s456 = scalar_lea.vmem [#allocation7], %s455
        // Predicated region
        $region65: #{tpu_custom_call.1} parent=55 // pred_check
          %p457 = pneg %p109
        $region66: #{tpu_custom_call.1} parent=55 // pred_check_branch
          %459 = sbr.rel (%p457) target = $region68
        $region67: #{tpu_custom_call.1} parent=55 // pred_region
          %461 = dma.done %s453, 128
        $region68: #{tpu_custom_call.1} parent=55 // pred_fallthru
          _
        // Predicated region
        $region69: #{tpu_custom_call.1} parent=55 // pred_check
          %p462 = pneg %p130
        $region70: #{tpu_custom_call.1} parent=55 // pred_check_branch
          %464 = sbr.rel (%p462) target = $region72
        $region71: #{tpu_custom_call.1} parent=55 // pred_region
          %466 = dma.done [#allocation9], 512
        $region72: #{tpu_custom_call.1} parent=55 // pred_fallthru
          _
        // Predicated region
        $region73: #{tpu_custom_call.1} parent=55 // pred_check
          %p467 = pneg %p151
        $region74: #{tpu_custom_call.1} parent=55 // pred_check_branch
          %469 = sbr.rel (%p467) target = $region76
        $region75: #{tpu_custom_call.1} parent=55 // pred_region
          %471 = dma.done [#allocation9], 512
        $region76: #{tpu_custom_call.1} parent=55 // pred_fallthru
          _
        // Predicated region
        $region77: #{tpu_custom_call.1} parent=55 // pred_check
          %p472 = pneg %p172
        $region78: #{tpu_custom_call.1} parent=55 // pred_check_branch
          %474 = sbr.rel (%p472) target = $region80
        $region79: #{tpu_custom_call.1} parent=55 // pred_region
          %476 = dma.done [#allocation12], 512
        $region80: #{tpu_custom_call.1} parent=55 // pred_fallthru
          _
        // Predicated region
        $region81: #{tpu_custom_call.1} parent=55 // pred_check
          %p477 = pneg %p193
        $region82: #{tpu_custom_call.1} parent=55 // pred_check_branch
          %479 = sbr.rel (%p477) target = $region84
        $region83: #{tpu_custom_call.1} parent=55 // pred_region
          %481 = dma.done [#allocation12], 512
        $region84: #{tpu_custom_call.1} parent=55 // pred_fallthru
          _
        %s482 = sand.u32 %s44, 1
        %s483 = scalar_lea.sflag [#allocation3], %s482
        %s484 = sand.u32 %s44, 1
        %s485 = smul.addr %s484, 8
        %s486 = scalar_lea.vmem [#allocation2], %s485
        %p487 = pneg %p57
        %p488 = pneg %p54
        %s489 = sand.u32 %s36, 1
        %s490 = scalar_lea.sflag [#allocation6], %s489
        %s491 = sand.u32 %s70, 1
        %s492 = smul.addr %s491, 8
        %s493 = scalar_lea.vmem [#allocation5], %s492
        %p494 = pneg %p83
        %p495 = pneg %p80
        %s496 = sand.u32 %s36, 1
        %s497 = scalar_lea.sflag [#allocation6], %s496
        %s498 = sand.u32 %s96, 1
        %s499 = smul.addr %s498, 8
        %s500 = scalar_lea.vmem [#allocation7], %s499
        %p501 = pneg %p109
        %p502 = pneg %p106
        %p503 = pneg %p130
        %p504 = pneg %p127
        %p505 = pneg %p151
        %p506 = pneg %p148
        %p507 = pneg %p172
        %p508 = pneg %p169
        %p509 = pneg %p193
        %p510 = pneg %p190
        %p511 = pneg %p214
        %p512 = pneg %p211
        %p513 = pneg %p235
        %p514 = pneg %p232
        %p515 = pneg %p261
        %p516 = pneg %p258
        %s517 = sand.u32 %s248, 1
        %s518 = scalar_lea.sflag [#allocation4], %s517
        %s519 = sand.u32 %s248, 1
        %s520 = smul.addr %s519, 8
        %s521 = scalar_lea.vmem [#allocation14], %s520
        %p522 = pneg %p287
        %p523 = pneg %p284
        %s524 = sand.u32 %s274, 1
        %s525 = scalar_lea.sflag [#allocation16], %s524
        %s526 = sand.u32 %s274, 1
        %s527 = smul.addr %s526, 32
        %s528 = scalar_lea.vmem [#allocation15], %s527
        %v529 = vld [vmem:[%s436] sm:$0xff]
        %v530 = vld [vmem:[%s446] sm:$0xff]
        %v531 = vld [vmem:[%s456] sm:$0xff]
        %v532 = vld [vmem:[#allocation8] sm:$0xff]
        %v533 = vld [vmem:[#allocation8 + $0x8] sm:$0xff]
        %v534 = vld [vmem:[#allocation8 + $0x10] sm:$0xff]
        %v535 = vld [vmem:[#allocation8 + $0x18] sm:$0xff]
        %vm536 = vcmask 261120
        %v538 = vsel %vm536, %v529, 0
        %540 = vmatpush.msra.mxu0 0.0
        %541 = vmatpush.msra.mxu0 0.0
        %542 = vmatpush.msra.mxu0 0.0
        %543 = vmatpush.msra.mxu0 0.0
        %544 = vmatpush.msra.mxu0 0.0
        %545 = vmatpush.msra.mxu0 0.0
        %546 = vmatpush.msra.mxu0 0.0
        %547 = vmatpush.msra.mxu0 0.0
        %548 = vmatpush.msra.mxu0 0.0
        %549 = vmatpush.msra.mxu0 0.0
        %550 = vmatpush.msra.mxu0 0.0
        %551 = vmatpush.msra.mxu0 0.0
        %552 = vmatpush.msra.mxu0 %v535
        %553 = vmatpush.msra.mxu0 %v534
        %554 = vmatpush.msra.mxu0 %v533
        %555 = vmatpush.msra.mxu0 %v532
        %556 = vmatmul.f32.gmra.mxu0 %v538
        %v557 = vpop.f32.mrf.mxu0
        %v558 = vadd.f32 0.0, %v557
        %559 = vdwg.mxu0
        %v560 = vld [vmem:[#allocation10] sm:$0xff]
        %v561 = vld [vmem:[#allocation10 + $0x8] sm:$0xff]
        %v562 = vld [vmem:[#allocation10 + $0x10] sm:$0xff]
        %v563 = vld [vmem:[#allocation10 + $0x18] sm:$0xff]
        %v565 = vsel %vm536, %v530, 0
        %567 = vmatpush.msra.mxu0 0.0
        %568 = vmatpush.msra.mxu0 0.0
        %569 = vmatpush.msra.mxu0 0.0
        %570 = vmatpush.msra.mxu0 0.0
        %571 = vmatpush.msra.mxu0 0.0
        %572 = vmatpush.msra.mxu0 0.0
        %573 = vmatpush.msra.mxu0 0.0
        %574 = vmatpush.msra.mxu0 0.0
        %575 = vmatpush.msra.mxu0 0.0
        %576 = vmatpush.msra.mxu0 0.0
        %577 = vmatpush.msra.mxu0 0.0
        %578 = vmatpush.msra.mxu0 0.0
        %579 = vmatpush.msra.mxu0 %v563
        %580 = vmatpush.msra.mxu0 %v562
        %581 = vmatpush.msra.mxu0 %v561
        %582 = vmatpush.msra.mxu0 %v560
        %583 = vmatmul.f32.gmra.mxu0 %v565
        %v584 = vpop.f32.mrf.mxu0
        %v585 = vadd.f32 0.0, %v584
        %586 = vdwg.mxu0
        %v587 = vld [vmem:[#allocation11] sm:$0xff]
        %v588 = vld [vmem:[#allocation11 + $0x8] sm:$0xff]
        %v589 = vld [vmem:[#allocation11 + $0x10] sm:$0xff]
        %v590 = vld [vmem:[#allocation11 + $0x18] sm:$0xff]
        %v592 = vsel %vm536, %v531, 0
        %594 = vmatpush.msra.mxu0 0.0
        %595 = vmatpush.msra.mxu0 0.0
        %596 = vmatpush.msra.mxu0 0.0
        %597 = vmatpush.msra.mxu0 0.0
        %598 = vmatpush.msra.mxu0 0.0
        %599 = vmatpush.msra.mxu0 0.0
        %600 = vmatpush.msra.mxu0 0.0
        %601 = vmatpush.msra.mxu0 0.0
        %602 = vmatpush.msra.mxu0 0.0
        %603 = vmatpush.msra.mxu0 0.0
        %604 = vmatpush.msra.mxu0 0.0
        %605 = vmatpush.msra.mxu0 0.0
        %606 = vmatpush.msra.mxu0 %v590
        %607 = vmatpush.msra.mxu0 %v589
        %608 = vmatpush.msra.mxu0 %v588
        %609 = vmatpush.msra.mxu0 %v587
        %610 = vmatmul.f32.gmra.mxu0 %v592
        %v611 = vpop.f32.mrf.mxu0
        %v612 = vadd.f32 0.0, %v611
        %613 = vdwg.mxu0
        %v614 = vmul.f32 %v558, 0.35355338
        %vm615 = vcmask 64512
        %v617 = vsel %vm615, %v614, 0
        %v620 = vsel %vm615, %v585, 0
        %622 = vmatpush.xpose.msra.mxu0 0.0
        %623 = vmatpush.xpose.msra.mxu0 0.0
        %624 = vmatpush.xpose.msra.mxu0 0.0
        %625 = vmatpush.xpose.msra.mxu0 0.0
        %626 = vmatpush.xpose.msra.mxu0 0.0
        %627 = vmatpush.xpose.msra.mxu0 0.0
        %628 = vmatpush.xpose.msra.mxu0 0.0
        %629 = vmatpush.xpose.msra.mxu0 0.0
        %630 = vmatpush.xpose.msra.mxu0 0.0
        %631 = vmatpush.xpose.msra.mxu0 0.0
        %632 = vmatpush.xpose.msra.mxu0 0.0
        %633 = vmatpush.xpose.msra.mxu0 0.0
        %634 = vmatpush.xpose.msra.mxu0 0.0
        %635 = vmatpush.xpose.msra.mxu0 0.0
        %636 = vmatpush.xpose.msra.mxu0 0.0
        %637 = vmatpush.xpose.msra.mxu0 %v620
        %638 = vmatmul.f32.gmra.mxu0 %v617
        %v639 = vpop.f32.mrf.mxu0
        %v640 = vadd.f32 0.0, %v639
        %641 = vdwg.mxu0
        %v642 = vsel %vm615, %v640, -inf
        %643 = vmax.xlane.f32.xlu0 %v642
        %v644 = vpop.xlane.xlu0 %643
        %v645 = vsub.f32 %v640, %v644
        %v646 = vmul.f32 %v645, 1.442695
        %v647 = vpow.pop %v646
        %v648 = vsel %vm615, %v647, 0.0
        %649 = vadd.xlane.f32.xlu0 %v648
        %v650 = vpop.xlane.xlu0 %649
        %v651 = vrcp.pop %v650
        %v652 = vmul.f32 %v650, %v651
        %v653 = vsub.f32 1.0, %v652
        %v654 = vmul.f32 %v651, %v653
        %v655 = vadd.f32 %v651, %v654
        %vm656 = vweird.f32 %v650
        %vm657 = vweird.f32 %v651
        %vm658 = vmor %vm656, %vm657
        %v659 = vsel %vm658, %v651, %v655
        %v660 = vand.u32 2147483647, %v650
        %vm661 = vcmp.eq.f32.partialorder %v660, 8.507059e+37
        %v662 = vand.u32 %v650, 2147483648
        %v663 = vor.u32 1.1754944e-38, %v662
        %v664 = vsel %vm661, %v663, %v659
        %v665 = vmul.f32 %v647, %v664
        %666 = vst.msk [vmem:[%s528] sm:$0xff] %vm615, %v665
        %v668 = vsel %vm615, %v665, 0
        %670 = vmatpush.msra.mxu0 0.0
        %671 = vmatpush.msra.mxu0 0.0
        %672 = vmatpush.msra.mxu0 0.0
        %673 = vmatpush.msra.mxu0 0.0
        %674 = vmatpush.msra.mxu0 0.0
        %675 = vmatpush.msra.mxu0 0.0
        %676 = vmatpush.msra.mxu0 0.0
        %677 = vmatpush.msra.mxu0 0.0
        %678 = vmatpush.msra.mxu0 0.0
        %679 = vmatpush.msra.mxu0 0.0
        %680 = vmatpush.msra.mxu0 0.0
        %681 = vmatpush.msra.mxu0 0.0
        %682 = vmatpush.msra.mxu0 0.0
        %683 = vmatpush.msra.mxu0 0.0
        %684 = vmatpush.msra.mxu0 0.0
        %685 = vmatpush.msra.mxu0 %v612
        %686 = vmatmul.f32.gmra.mxu0 %v668
        %v687 = vpop.f32.mrf.mxu0
        %v688 = vadd.f32 0.0, %v687
        %689 = vdwg.mxu0
        %690 = vrot.lane.b32.xlu0 %v614, 120
        %v691 = vpop.permute.xlu0 %690
        %692 = vrot.lane.b32.xlu0 %v585, 120
        %v693 = vpop.permute.xlu0 %692
        %v694 = vsel %vm615, %v691, 0
        %v696 = vsel %vm615, %v693, 0
        %698 = vmatpush.xpose.msra.mxu0 0.0
        %699 = vmatpush.xpose.msra.mxu0 0.0
        %700 = vmatpush.xpose.msra.mxu0 0.0
        %701 = vmatpush.xpose.msra.mxu0 0.0
        %702 = vmatpush.xpose.msra.mxu0 0.0
        %703 = vmatpush.xpose.msra.mxu0 0.0
        %704 = vmatpush.xpose.msra.mxu0 0.0
        %705 = vmatpush.xpose.msra.mxu0 0.0
        %706 = vmatpush.xpose.msra.mxu0 0.0
        %707 = vmatpush.xpose.msra.mxu0 0.0
        %708 = vmatpush.xpose.msra.mxu0 0.0
        %709 = vmatpush.xpose.msra.mxu0 0.0
        %710 = vmatpush.xpose.msra.mxu0 0.0
        %711 = vmatpush.xpose.msra.mxu0 0.0
        %712 = vmatpush.xpose.msra.mxu0 0.0
        %713 = vmatpush.xpose.msra.mxu0 %v696
        %714 = vmatmul.f32.gmra.mxu0 %v694
        %v715 = vpop.f32.mrf.mxu0
        %v716 = vadd.f32 0.0, %v715
        %717 = vdwg.mxu0
        %v718 = vsel %vm615, %v716, -inf
        %719 = vmax.xlane.f32.xlu0 %v718
        %v720 = vpop.xlane.xlu0 %719
        %v721 = vsub.f32 %v716, %v720
        %v722 = vmul.f32 %v721, 1.442695
        %v723 = vpow.pop %v722
        %v724 = vsel %vm615, %v723, 0.0
        %725 = vadd.xlane.f32.xlu0 %v724
        %v726 = vpop.xlane.xlu0 %725
        %v727 = vrcp.pop %v726
        %v728 = vmul.f32 %v726, %v727
        %v729 = vsub.f32 1.0, %v728
        %v730 = vmul.f32 %v727, %v729
        %v731 = vadd.f32 %v727, %v730
        %vm732 = vweird.f32 %v726
        %vm733 = vweird.f32 %v727
        %vm734 = vmor %vm732, %vm733
        %v735 = vsel %vm734, %v727, %v731
        %v736 = vand.u32 2147483647, %v726
        %vm737 = vcmp.eq.f32.partialorder %v736, 8.507059e+37
        %v738 = vand.u32 %v726, 2147483648
        %v739 = vor.u32 1.1754944e-38, %v738
        %v740 = vsel %vm737, %v739, %v735
        %v741 = vmul.f32 %v723, %v740
        %s742 = scalar_lea.vmem %s528, 8 [#allocation15]
        %743 = vst.msk [vmem:[%s742] sm:$0xff] %vm615, %v741
        %745 = vrot.lane.b32.xlu0 %v612, 120
        %v746 = vpop.permute.xlu0 %745
        %v749 = vsel %vm615, %v741, 0
        %751 = vmatpush.msra.mxu0 0.0
        %752 = vmatpush.msra.mxu0 0.0
        %753 = vmatpush.msra.mxu0 0.0
        %754 = vmatpush.msra.mxu0 0.0
        %755 = vmatpush.msra.mxu0 0.0
        %756 = vmatpush.msra.mxu0 0.0
        %757 = vmatpush.msra.mxu0 0.0
        %758 = vmatpush.msra.mxu0 0.0
        %759 = vmatpush.msra.mxu0 0.0
        %760 = vmatpush.msra.mxu0 0.0
        %761 = vmatpush.msra.mxu0 0.0
        %762 = vmatpush.msra.mxu0 0.0
        %763 = vmatpush.msra.mxu0 0.0
        %764 = vmatpush.msra.mxu0 0.0
        %765 = vmatpush.msra.mxu0 0.0
        %766 = vmatpush.msra.mxu0 %v746
        %767 = vmatmul.f32.gmra.mxu0 %v749
        %v768 = vpop.f32.mrf.mxu0
        %v769 = vadd.f32 0.0, %v768
        %770 = vdwg.mxu0
        %771 = vrot.lane.b32.xlu0 %v614, 112
        %v772 = vpop.permute.xlu0 %771
        %773 = vrot.lane.b32.xlu0 %v585, 112
        %v774 = vpop.permute.xlu0 %773
        %v775 = vsel %vm615, %v772, 0
        %v777 = vsel %vm615, %v774, 0
        %779 = vmatpush.xpose.msra.mxu0 0.0
        %780 = vmatpush.xpose.msra.mxu0 0.0
        %781 = vmatpush.xpose.msra.mxu0 0.0
        %782 = vmatpush.xpose.msra.mxu0 0.0
        %783 = vmatpush.xpose.msra.mxu0 0.0
        %784 = vmatpush.xpose.msra.mxu0 0.0
        %785 = vmatpush.xpose.msra.mxu0 0.0
        %786 = vmatpush.xpose.msra.mxu0 0.0
        %787 = vmatpush.xpose.msra.mxu0 0.0
        %788 = vmatpush.xpose.msra.mxu0 0.0
        %789 = vmatpush.xpose.msra.mxu0 0.0
        %790 = vmatpush.xpose.msra.mxu0 0.0
        %791 = vmatpush.xpose.msra.mxu0 0.0
        %792 = vmatpush.xpose.msra.mxu0 0.0
        %793 = vmatpush.xpose.msra.mxu0 0.0
        %794 = vmatpush.xpose.msra.mxu0 %v777
        %795 = vmatmul.f32.gmra.mxu0 %v775
        %v796 = vpop.f32.mrf.mxu0
        %v797 = vadd.f32 0.0, %v796
        %798 = vdwg.mxu0
        %v799 = vsel %vm615, %v797, -inf
        %800 = vmax.xlane.f32.xlu0 %v799
        %v801 = vpop.xlane.xlu0 %800
        %v802 = vsub.f32 %v797, %v801
        %v803 = vmul.f32 %v802, 1.442695
        %v804 = vpow.pop %v803
        %v805 = vsel %vm615, %v804, 0.0
        %806 = vadd.xlane.f32.xlu0 %v805
        %v807 = vpop.xlane.xlu0 %806
        %v808 = vrcp.pop %v807
        %v809 = vmul.f32 %v807, %v808
        %v810 = vsub.f32 1.0, %v809
        %v811 = vmul.f32 %v808, %v810
        %v812 = vadd.f32 %v808, %v811
        %vm813 = vweird.f32 %v807
        %vm814 = vweird.f32 %v808
        %vm815 = vmor %vm813, %vm814
        %v816 = vsel %vm815, %v808, %v812
        %v817 = vand.u32 2147483647, %v807
        %vm818 = vcmp.eq.f32.partialorder %v817, 8.507059e+37
        %v819 = vand.u32 %v807, 2147483648
        %v820 = vor.u32 1.1754944e-38, %v819
        %v821 = vsel %vm818, %v820, %v816
        %v822 = vmul.f32 %v804, %v821
        %s823 = scalar_lea.vmem %s528, 16 [#allocation15]
        %824 = vst.msk [vmem:[%s823] sm:$0xff] %vm615, %v822
        %825 = vrot.lane.b32.xlu0 %v612, 112
        %v826 = vpop.permute.xlu0 %825
        %v829 = vsel %vm615, %v822, 0
        %831 = vmatpush.msra.mxu0 0.0
        %832 = vmatpush.msra.mxu0 0.0
        %833 = vmatpush.msra.mxu0 0.0
        %834 = vmatpush.msra.mxu0 0.0
        %835 = vmatpush.msra.mxu0 0.0
        %836 = vmatpush.msra.mxu0 0.0
        %837 = vmatpush.msra.mxu0 0.0
        %838 = vmatpush.msra.mxu0 0.0
        %839 = vmatpush.msra.mxu0 0.0
        %840 = vmatpush.msra.mxu0 0.0
        %841 = vmatpush.msra.mxu0 0.0
        %842 = vmatpush.msra.mxu0 0.0
        %843 = vmatpush.msra.mxu0 0.0
        %844 = vmatpush.msra.mxu0 0.0
        %845 = vmatpush.msra.mxu0 0.0
        %846 = vmatpush.msra.mxu0 %v826
        %847 = vmatmul.f32.gmra.mxu0 %v829
        %v848 = vpop.f32.mrf.mxu0
        %v849 = vadd.f32 0.0, %v848
        %850 = vdwg.mxu0
        %851 = vrot.lane.b32.xlu0 %v614, 104
        %v852 = vpop.permute.xlu0 %851
        %853 = vrot.lane.b32.xlu0 %v585, 104
        %v854 = vpop.permute.xlu0 %853
        %v855 = vsel %vm615, %v852, 0
        %v857 = vsel %vm615, %v854, 0
        %859 = vmatpush.xpose.msra.mxu0 0.0
        %860 = vmatpush.xpose.msra.mxu0 0.0
        %861 = vmatpush.xpose.msra.mxu0 0.0
        %862 = vmatpush.xpose.msra.mxu0 0.0
        %863 = vmatpush.xpose.msra.mxu0 0.0
        %864 = vmatpush.xpose.msra.mxu0 0.0
        %865 = vmatpush.xpose.msra.mxu0 0.0
        %866 = vmatpush.xpose.msra.mxu0 0.0
        %867 = vmatpush.xpose.msra.mxu0 0.0
        %868 = vmatpush.xpose.msra.mxu0 0.0
        %869 = vmatpush.xpose.msra.mxu0 0.0
        %870 = vmatpush.xpose.msra.mxu0 0.0
        %871 = vmatpush.xpose.msra.mxu0 0.0
        %872 = vmatpush.xpose.msra.mxu0 0.0
        %873 = vmatpush.xpose.msra.mxu0 0.0
        %874 = vmatpush.xpose.msra.mxu0 %v857
        %875 = vmatmul.f32.gmra.mxu0 %v855
        %v876 = vpop.f32.mrf.mxu0
        %v877 = vadd.f32 0.0, %v876
        %878 = vdwg.mxu0
        %v879 = vsel %vm615, %v877, -inf
        %880 = vmax.xlane.f32.xlu0 %v879
        %v881 = vpop.xlane.xlu0 %880
        %v882 = vsub.f32 %v877, %v881
        %v883 = vmul.f32 %v882, 1.442695
        %v884 = vpow.pop %v883
        %v885 = vsel %vm615, %v884, 0.0
        %886 = vadd.xlane.f32.xlu0 %v885
        %v887 = vpop.xlane.xlu0 %886
        %v888 = vrcp.pop %v887
        %v889 = vmul.f32 %v887, %v888
        %v890 = vsub.f32 1.0, %v889
        %v891 = vmul.f32 %v888, %v890
        %v892 = vadd.f32 %v888, %v891
        %vm893 = vweird.f32 %v887
        %vm894 = vweird.f32 %v888
        %vm895 = vmor %vm893, %vm894
        %v896 = vsel %vm895, %v888, %v892
        %v897 = vand.u32 2147483647, %v887
        %vm898 = vcmp.eq.f32.partialorder %v897, 8.507059e+37
        %v899 = vand.u32 %v887, 2147483648
        %v900 = vor.u32 1.1754944e-38, %v899
        %v901 = vsel %vm898, %v900, %v896
        %v902 = vmul.f32 %v884, %v901
        %s903 = scalar_lea.vmem %s528, 24 [#allocation15]
        %904 = vst.msk [vmem:[%s903] sm:$0xff] %vm615, %v902
        %905 = vrot.lane.b32.xlu0 %v612, 104
        %v906 = vpop.permute.xlu0 %905
        %v909 = vsel %vm615, %v902, 0
        %911 = vmatpush.msra.mxu0 0.0
        %912 = vmatpush.msra.mxu0 0.0
        %913 = vmatpush.msra.mxu0 0.0
        %914 = vmatpush.msra.mxu0 0.0
        %915 = vmatpush.msra.mxu0 0.0
        %916 = vmatpush.msra.mxu0 0.0
        %917 = vmatpush.msra.mxu0 0.0
        %918 = vmatpush.msra.mxu0 0.0
        %919 = vmatpush.msra.mxu0 0.0
        %920 = vmatpush.msra.mxu0 0.0
        %921 = vmatpush.msra.mxu0 0.0
        %922 = vmatpush.msra.mxu0 0.0
        %923 = vmatpush.msra.mxu0 0.0
        %924 = vmatpush.msra.mxu0 0.0
        %925 = vmatpush.msra.mxu0 0.0
        %926 = vmatpush.msra.mxu0 %v906
        %927 = vmatmul.f32.gmra.mxu0 %v909
        %v928 = vpop.f32.mrf.mxu0
        %v929 = vadd.f32 0.0, %v928
        %930 = vdwg.mxu0
        %932 = vrot.lane.b32.xlu0 %v769, 8
        %v933 = vpop.permute.xlu0 %932
        %936 = vrot.lane.b32.xlu0 %v849, 16
        %v937 = vpop.permute.xlu0 %936
        %940 = vrot.lane.b32.xlu0 %v929, 24
        %v941 = vpop.permute.xlu0 %940
        %v943 = vsel %vm615, %v688, %v933
        %vm944 = vcmask 130048
        %v945 = vsel %vm944, %v943, %v937
        %vm946 = vcmask 195584
        %v947 = vsel %vm946, %v945, %v941
        %v948 = vld [vmem:[#allocation13] sm:$0xff]
        %v949 = vld [vmem:[#allocation13 + $0x8] sm:$0xff]
        %v950 = vld [vmem:[#allocation13 + $0x10] sm:$0xff]
        %v951 = vld [vmem:[#allocation13 + $0x18] sm:$0xff]
        %v953 = vsel %vm536, %v947, 0
        %955 = vmatpush.msra.mxu0 0.0
        %956 = vmatpush.msra.mxu0 0.0
        %957 = vmatpush.msra.mxu0 0.0
        %958 = vmatpush.msra.mxu0 0.0
        %959 = vmatpush.msra.mxu0 0.0
        %960 = vmatpush.msra.mxu0 0.0
        %961 = vmatpush.msra.mxu0 0.0
        %962 = vmatpush.msra.mxu0 0.0
        %963 = vmatpush.msra.mxu0 0.0
        %964 = vmatpush.msra.mxu0 0.0
        %965 = vmatpush.msra.mxu0 0.0
        %966 = vmatpush.msra.mxu0 0.0
        %967 = vmatpush.msra.mxu0 %v951
        %968 = vmatpush.msra.mxu0 %v950
        %969 = vmatpush.msra.mxu0 %v949
        %970 = vmatpush.msra.mxu0 %v948
        %971 = vmatmul.f32.gmra.mxu0 %v953
        %v972 = vpop.f32.mrf.mxu0
        %v973 = vadd.f32 %v529, %v972
        %974 = vdwg.mxu0
        %v975 = vsel %vm536, %v973, 0.0
        %976 = vadd.xlane.f32.xlu0 %v975
        %v977 = vpop.xlane.xlu0 %976
        %v978 = vrcp.pop 32.0
        %v979 = vmul.f32 32.0, %v978
        %v980 = vsub.f32 1.0, %v979
        %v981 = vmul.f32 %v978, %v980
        %v982 = vadd.f32 %v978, %v981
        %vm983 = vweird.f32 %v978
        %v984 = vsel %vm983, %v978, %v982
        %v985 = vmul.f32 %v977, %v984
        %v986 = vsub.f32 %v973, %v985
        %v987 = vmul.f32 %v986, %v986
        %v988 = vsel %vm536, %v987, 0.0
        %989 = vadd.xlane.f32.xlu0 %v988
        %v990 = vpop.xlane.xlu0 %989
        %v991 = vmul.f32 %v990, %v984
        %v992 = vadd.f32 %v991, 1e-06
        %v993 = vrsqrt.pop %v992
        %v994 = vmul.f32 %v993, %v992
        %v995 = vmul.f32 %v994, %v993
        %v996 = vmul.f32 0.5, %v995
        %v997 = vsub.f32 1.5, %v996
        %v998 = vmul.f32 %v993, %v997
        %vm999 = vweird.f32 %v992
        %vm1000 = vweird.f32 %v993
        %vm1001 = vmor %vm999, %vm1000
        %v1002 = vsel %vm1001, %v993, %v998
        %v1003 = vmul.f32 %v986, %v1002
        %v1004 = vld [vmem:[%s7] sm:$0x1]
        %v1006 = vperm.slane %v1004, 0
        %v1008 = vmul.f32 %v1003, %v1006
        %v1009 = vld [vmem:[%s8] sm:$0x1]
        %v1011 = vperm.slane %v1009, 0
        %v1013 = vadd.f32 %v1008, %v1011
        %1014 = vst.msk [vmem:[%s521] sm:$0xff] %vm536, %v1013
        %s1015 = sand.u32 %s248, 1
        %s1016 = scalar_lea.sflag [#allocation4], %s1015
        %s1017 = sand.u32 %s248, 1
        %s1018 = smul.addr %s1017, 8
        %s1019 = scalar_lea.vmem [#allocation14], %s1018
        %s1020 = sand.u32 %s274, 1
        %s1021 = scalar_lea.sflag [#allocation16], %s1020
        %s1022 = sand.u32 %s274, 1
        %s1023 = smul.addr %s1022, 32
        %s1024 = scalar_lea.vmem [#allocation15], %s1023
        // Predicated region
        $region85: #{tpu_custom_call.1} parent=55 // pred_check
          %p1025 = pneg %p258
        $region86: #{tpu_custom_call.1} parent=55 // pred_check_branch
          %1027 = sbr.rel (%p1025) target = $region88
        $region87: #{tpu_custom_call.1} parent=55 // pred_region
          %1029 = vsyncadd %s1016, 0
          %s1030 = smul.addr %s36, 8
          %s1031 = scalar_lea.hbm %s9, %s1030
          %s1033 = sshll.u32 %s1019, 4
          %s1034 = int_to_ptr.vmem [resolvable:$true] %s1033
          %s1035 = sshll.u32 %s1031, 4
          %s1036 = int_to_ptr.hbm [resolvable:$true] %s1035
          %1038 = dma.vmem_to_hbm [thread:$0]  %s1034, 128, %s1036, %s1016
        $region88: #{tpu_custom_call.1} parent=55 // pred_fallthru
          _
        // Predicated region
        $region89: #{tpu_custom_call.1} parent=55 // pred_check
          %p1039 = pneg %p284
        $region90: #{tpu_custom_call.1} parent=55 // pred_check_branch
          %1041 = sbr.rel (%p1039) target = $region92
        $region91: #{tpu_custom_call.1} parent=55 // pred_region
          %1043 = vsyncadd %s1021, 0
          %s1044 = smul.addr %s36, 4
          %s1045 = smul.addr %s1044, 8
          %s1046 = scalar_lea.hbm %s10, %s1045
          %s1047 = sshll.u32 %s1024, 4
          %s1048 = int_to_ptr.vmem [resolvable:$true] %s1047
          %s1049 = sshll.u32 %s1046, 4
          %s1050 = int_to_ptr.hbm [resolvable:$true] %s1049
          %1055 = dma.vmem_to_hbm [thread:$0]  %s1048, 512, %s1050, %s1021, 128, 128, 8
        $region92: #{tpu_custom_call.1} parent=55 // pred_fallthru
          _
      $region56: #{tpu_custom_call.1} parent=5 // pred_fallthru
        _
      %p1056 = scmp.le.s32.totalorder 2, %s31
      // Predicated region
      $region93: #{tpu_custom_call.1} parent=5 // pred_check
        %p1057 = pneg %p1056
      $region94: #{tpu_custom_call.1} parent=5 // pred_check_branch
        %1059 = sbr.rel (%p1057) target = $region96
      $region95: #{tpu_custom_call.1} parent=5 // pred_region
        %s1060 = ssub.s32 %s31, 2
        // Predicated region
        $region97: #{tpu_custom_call.1} parent=95 // pred_check
          %p1061 = pneg %p264
        $region98: #{tpu_custom_call.1} parent=95 // pred_check_branch
          %1063 = sbr.rel (%p1061) target = $region100
        $region99: #{tpu_custom_call.1} parent=95 // pred_region
          %s1064 = sand.u32 %s249, 1
          %s1065 = scalar_lea.sflag [#allocation4], %s1064
          %s1066 = sand.u32 %s249, 1
          %s1067 = smul.addr %s1066, 8
          %s1068 = scalar_lea.vmem [#allocation14], %s1067
          %1070 = dma.done %s1065, 128
        $region100: #{tpu_custom_call.1} parent=95 // pred_fallthru
          _
        // Predicated region
        $region101: #{tpu_custom_call.1} parent=95 // pred_check
          %p1071 = pneg %p290
        $region102: #{tpu_custom_call.1} parent=95 // pred_check_branch
          %1073 = sbr.rel (%p1071) target = $region104
        $region103: #{tpu_custom_call.1} parent=95 // pred_region
          %s1074 = sand.u32 %s275, 1
          %s1075 = scalar_lea.sflag [#allocation16], %s1074
          %s1076 = sand.u32 %s275, 1
          %s1077 = smul.addr %s1076, 32
          %s1078 = scalar_lea.vmem [#allocation15], %s1077
          %1080 = dma.done %s1075, 512
        $region104: #{tpu_custom_call.1} parent=95 // pred_fallthru
          _
      $region96: #{tpu_custom_call.1} parent=5 // pred_fallthru
        _
    $region6: #{tpu_custom_call.1} parent=1 // loop_footer
      %s35 = sadd.s32 1, %s31
    $region7: #{tpu_custom_call.1} parent=1 // loop_footer_branch
      %30 = sbr.rel target = $region3
    $region8: #{tpu_custom_call.1} parent=1 // loop_exit
      _
    %1081 = vsyncpa [#allocation3], 1
    %s1082 = scalar_lea.sflag [#allocation3], 1
    %1083 = vsyncpa %s1082, 1
    %1084 = vsyncpa [#allocation6], 1
    %s1085 = scalar_lea.sflag [#allocation6], 1
    %1086 = vsyncpa %s1085, 1
    %1087 = vsyncpa [#allocation9], 1
    %1088 = vsyncpa [#allocation12], 1
    %1089 = vsyncpa [#allocation4], 1
    %s1090 = scalar_lea.sflag [#allocation4], 1
    %1091 = vsyncpa %s1090, 1
    %1092 = vsyncpa [#allocation16], 1
    %s1093 = scalar_lea.sflag [#allocation16], 1
    %1094 = vsyncpa %s1093, 1

// kernel: tpu_custom_call.1
$region0: #{tpu_custom_call.1}
  #allocation0 [shape = 'u32[]', space=smem, size = 0x4, offset = 0x4, fixed_abs, tag = 'smem constant byte address 0x4 - core index']
  #allocation1 [shape = 'u32[72,128]{1,0:T(1,128)}', space=vmem, size = 0x9000, scoped, tag = 'internal scratch']
  %s0 = inlined_call_operand.hbm [shape: f32[2,8,32], index: 0, kind: input, shape index: {}]
  %s1 = inlined_call_operand.hbm [shape: f32[2,8,32], index: 1, kind: input, shape index: {}]
  %s2 = inlined_call_operand.hbm [shape: f32[2,8,32], index: 2, kind: input, shape index: {}]
  %s3 = inlined_call_operand.hbm [shape: f32[32,32], index: 3, kind: input, shape index: {}]
  %s4 = inlined_call_operand.hbm [shape: f32[32,32], index: 4, kind: input, shape index: {}]
  %s5 = inlined_call_operand.hbm [shape: f32[32,32], index: 5, kind: input, shape index: {}]
  %s6 = inlined_call_operand.hbm [shape: f32[32,32], index: 6, kind: input, shape index: {}]
  %s7 = inlined_call_operand.vmem [shape: f32[1,32], index: 7, kind: input, shape index: {}]
  %s8 = inlined_call_operand.vmem [shape: f32[1,32], index: 8, kind: input, shape index: {}]
  %s9 = inlined_call_operand.hbm [shape: f32[2,8,32], index: 9, kind: output, shape index: {0}]
  %s10 = inlined_call_operand.hbm [shape: f32[2,4,8,8], index: 10, kind: output, shape index: {1}]
  %11 = xla_tuple %s9, %s10
  %s12 = sld [smem:[#allocation0]]
  $region105: #{tpu_custom_call.1} parent=0
    _
  %s14 = ssub.s32 1, %s12
  %s15 = scalar_select 0, %s14, %s12
  $region1: #{tpu_custom_call.1} parent=0
    #allocation2 [shape = 'u8[8192]{0}', space=vmem, size = 0x2000, scoped, tag = 'input window, operand 0']
    #allocation3 [shape = 's32[2]{0}', space=sflag, size = 0x8, scoped, tag = 'scoped memory for tpu_custom_call.1']
    #allocation4 [shape = 's32[2]{0}', space=sflag, size = 0x8, scoped, tag = 'scoped memory for tpu_custom_call.1']
    #allocation5 [shape = 'u8[8192]{0}', space=vmem, size = 0x2000, scoped, tag = 'input window, operand 1']
    #allocation6 [shape = 's32[2]{0}', space=sflag, size = 0x8, scoped, tag = 'scoped memory for tpu_custom_call.1']
    #allocation7 [shape = 'u8[8192]{0}', space=vmem, size = 0x2000, scoped, tag = 'input window, operand 2']
    #allocation8 [shape = 'u8[16384]{0}', space=vmem, size = 0x4000, scoped, tag = 'input window, operand 3, single buffered']
    #allocation9 [shape = 's32[1]{0}', space=sflag, size = 0x4, scoped, tag = 'scoped memory for tpu_custom_call.1']
    #allocation10 [shape = 'u8[16384]{0}', space=vmem, size = 0x4000, scoped, tag = 'input window, operand 4, single buffered']
    #allocation11 [shape = 'u8[16384]{0}', space=vmem, size = 0x4000, scoped, tag = 'input window, operand 5, single buffered']
    #allocation12 [shape = 's32[1]{0}', space=sflag, size = 0x4, scoped, tag = 'scoped memory for tpu_custom_call.1']
    #allocation13 [shape = 'u8[16384]{0}', space=vmem, size = 0x4000, scoped, tag = 'input window, operand 6, single buffered']
    #allocation14 [shape = 'u8[8192]{0}', space=vmem, size = 0x2000, scoped, tag = 'output window, operand 0']
    #allocation15 [shape = 'u8[32768]{0}', space=vmem, size = 0x8000, scoped, tag = 'output window, operand 1']
    #allocation16 [shape = 's32[2]{0}', space=sflag, size = 0x8, scoped, tag = 'scoped memory for tpu_custom_call.1']
    %16 = vsyncpa [#allocation3], 0
    %s17 = scalar_lea.sflag [#allocation3], 1
    %18 = vsyncpa %s17, 0
    %19 = vsyncpa [#allocation6], 0
    %s20 = scalar_lea.sflag [#allocation6], 1
    %21 = vsyncpa %s20, 0
    %22 = vsyncpa [#allocation9], 0
    %23 = vsyncpa [#allocation12], 0
    %24 = vsyncpa [#allocation4], 0
    %s25 = scalar_lea.sflag [#allocation4], 1
    %26 = vsyncpa %s25, 0
    %27 = vsyncpa [#allocation16], 0
    %s28 = scalar_lea.sflag [#allocation16], 1
    %29 = vsyncpa %s28, 0
    loop: start=0, step=1, limit=4
    $region2: #{tpu_custom_call.1} parent=1 // loop_pre_header
      _
    $region3: #{tpu_custom_call.1} parent=1 // loop_header
      %s31 = sphi 0, %s35
      %p32 = scmp.ge.s32.totalorder %s31, 4
      %s41 = sphi 0, %s43
      %s44 = sphi 0, %s41
      %s45 = sphi 0, %s44
      %s61 = sphi 0, %s45
      %s67 = sphi 0, %s69
      %s70 = sphi 0, %s67
      %s71 = sphi 0, %s70
      %s87 = sphi 0, %s71
      %s93 = sphi 0, %s95
      %s96 = sphi 0, %s93
      %s97 = sphi 0, %s96
      %s113 = sphi 0, %s97
      %s117 = sphi 0, %s117
      %s119 = sphi 0, %s117
      %s120 = sphi 0, %s119
      %s134 = sphi 0, %s120
      %s138 = sphi 0, %s138
      %s140 = sphi 0, %s138
      %s141 = sphi 0, %s140
      %s155 = sphi 0, %s141
      %s159 = sphi 0, %s159
      %s161 = sphi 0, %s159
      %s162 = sphi 0, %s161
      %s176 = sphi 0, %s162
      %s180 = sphi 0, %s180
      %s182 = sphi 0, %s180
      %s183 = sphi 0, %s182
      %s197 = sphi 0, %s183
      %s201 = sphi 0, %s201
      %s203 = sphi 0, %s201
      %s204 = sphi 0, %s203
      %s218 = sphi 0, %s204
      %s222 = sphi 0, %s222
      %s224 = sphi 0, %s222
      %s225 = sphi 0, %s224
      %s239 = sphi 0, %s225
      %s245 = sphi 0, %s247
      %s248 = sphi 0, %s245
      %s249 = sphi 0, %s248
      %s265 = sphi 0, %s249
      %s271 = sphi 0, %s273
      %s274 = sphi 0, %s271
      %s275 = sphi 0, %s274
      %s291 = sphi 0, %s275
    $region4: #{tpu_custom_call.1} parent=1 // loop_header_branch
      %34 = sbr.rel (%p32) target = $region8
    $region5: #{tpu_custom_call.1} parent=1 // loop_body
      %s36 = ssub.s32 %s31, 1
      %s37 = ssub.s32 %s31, 2
      %s38 = sadd.s32 %s31, 1
      %s39 = ssub.s32 %s31, %s38
      %p40 = scmp.eq.s32.totalorder %s39, 0
      %s42 = sadd.s32 %s41, 1
      %s43 = scalar_select %p40, %s41, %s42
      %p46 = pneg %p40
      %p47 = scmp.eq.s32.totalorder %s31, 1
      %p48 = por %p46, %p47
      %p49 = scmp.ne.s32.totalorder %s41, %s44
      %p50 = scmp.eq.s32.totalorder %s31, 0
      %p51 = por %p49, %p50
      %p52 = scmp.ne.s32.totalorder %s41, %s44
      %p53 = scmp.eq.s32.totalorder %s36, 1
      %p54 = por %p52, %p53
      %p55 = scmp.ne.s32.totalorder %s44, %s45
      %p56 = scmp.eq.s32.totalorder %s36, 0
      %p57 = por %p55, %p56
      %p58 = scmp.ne.s32.totalorder %s44, %s45
      %p59 = scmp.eq.s32.totalorder %s37, 1
      %p60 = por %p58, %p59
      %p62 = scmp.ne.s32.totalorder %s45, %s61
      %p63 = scmp.eq.s32.totalorder %s37, 0
      %p64 = por %p62, %p63
      %s65 = ssub.s32 %s31, %s38
      %p66 = scmp.eq.s32.totalorder %s65, 0
      %s68 = sadd.s32 %s67, 1
      %s69 = scalar_select %p66, %s67, %s68
      %p72 = pneg %p66
      %p73 = scmp.eq.s32.totalorder %s31, 1
      %p74 = por %p72, %p73
      %p75 = scmp.ne.s32.totalorder %s67, %s70
      %p76 = scmp.eq.s32.totalorder %s31, 0
      %p77 = por %p75, %p76
      %p78 = scmp.ne.s32.totalorder %s67, %s70
      %p79 = scmp.eq.s32.totalorder %s36, 1
      %p80 = por %p78, %p79
      %p81 = scmp.ne.s32.totalorder %s70, %s71
      %p82 = scmp.eq.s32.totalorder %s36, 0
      %p83 = por %p81, %p82
      %p84 = scmp.ne.s32.totalorder %s70, %s71
      %p85 = scmp.eq.s32.totalorder %s37, 1
      %p86 = por %p84, %p85
      %p88 = scmp.ne.s32.totalorder %s71, %s87
      %p89 = scmp.eq.s32.totalorder %s37, 0
      %p90 = por %p88, %p89
      %s91 = ssub.s32 %s31, %s38
      %p92 = scmp.eq.s32.totalorder %s91, 0
      %s94 = sadd.s32 %s93, 1
      %s95 = scalar_select %p92, %s93, %s94
      %p98 = pneg %p92
      %p99 = scmp.eq.s32.totalorder %s31, 1
      %p100 = por %p98, %p99
      %p101 = scmp.ne.s32.totalorder %s93, %s96
      %p102 = scmp.eq.s32.totalorder %s31, 0
      %p103 = por %p101, %p102
      %p104 = scmp.ne.s32.totalorder %s93, %s96
      %p105 = scmp.eq.s32.totalorder %s36, 1
      %p106 = por %p104, %p105
      %p107 = scmp.ne.s32.totalorder %s96, %s97
      %p108 = scmp.eq.s32.totalorder %s36, 0
      %p109 = por %p107, %p108
      %p110 = scmp.ne.s32.totalorder %s96, %s97
      %p111 = scmp.eq.s32.totalorder %s37, 1
      %p112 = por %p110, %p111
      %p114 = scmp.ne.s32.totalorder %s97, %s113
      %p115 = scmp.eq.s32.totalorder %s37, 0
      %p116 = por %p114, %p115
      %s118 = sadd.s32 %s117, 1
      %p121 = scmp.eq.s32.totalorder %s31, 1
      %p122 = scmp.ne.s32.totalorder %s117, %s119
      %p123 = scmp.eq.s32.totalorder %s31, 0
      %p124 = por %p122, %p123
      %p125 = scmp.ne.s32.totalorder %s117, %s119
      %p126 = scmp.eq.s32.totalorder %s36, 1
      %p127 = por %p125, %p126
      %p128 = scmp.ne.s32.totalorder %s119, %s120
      %p129 = scmp.eq.s32.totalorder %s36, 0
      %p130 = por %p128, %p129
      %p131 = scmp.ne.s32.totalorder %s119, %s120
      %p132 = scmp.eq.s32.totalorder %s37, 1
      %p133 = por %p131, %p132
      %p135 = scmp.ne.s32.totalorder %s120, %s134
      %p136 = scmp.eq.s32.totalorder %s37, 0
      %p137 = por %p135, %p136
      %s139 = sadd.s32 %s138, 1
      %p142 = scmp.eq.s32.totalorder %s31, 1
      %p143 = scmp.ne.s32.totalorder %s138, %s140
      %p144 = scmp.eq.s32.totalorder %s31, 0
      %p145 = por %p143, %p144
      %p146 = scmp.ne.s32.totalorder %s138, %s140
      %p147 = scmp.eq.s32.totalorder %s36, 1
      %p148 = por %p146, %p147
      %p149 = scmp.ne.s32.totalorder %s140, %s141
      %p150 = scmp.eq.s32.totalorder %s36, 0
      %p151 = por %p149, %p150
      %p152 = scmp.ne.s32.totalorder %s140, %s141
      %p153 = scmp.eq.s32.totalorder %s37, 1
      %p154 = por %p152, %p153
      %p156 = scmp.ne.s32.totalorder %s141, %s155
      %p157 = scmp.eq.s32.totalorder %s37, 0
      %p158 = por %p156, %p157
      %s160 = sadd.s32 %s159, 1
      %p163 = scmp.eq.s32.totalorder %s31, 1
      %p164 = scmp.ne.s32.totalorder %s159, %s161
      %p165 = scmp.eq.s32.totalorder %s31, 0
      %p166 = por %p164, %p165
      %p167 = scmp.ne.s32.totalorder %s159, %s161
      %p168 = scmp.eq.s32.totalorder %s36, 1
      %p169 = por %p167, %p168
      %p170 = scmp.ne.s32.totalorder %s161, %s162
      %p171 = scmp.eq.s32.totalorder %s36, 0
      %p172 = por %p170, %p171
      %p173 = scmp.ne.s32.totalorder %s161, %s162
      %p174 = scmp.eq.s32.totalorder %s37, 1
      %p175 = por %p173, %p174
      %p177 = scmp.ne.s32.totalorder %s162, %s176
      %p178 = scmp.eq.s32.totalorder %s37, 0
      %p179 = por %p177, %p178
      %s181 = sadd.s32 %s180, 1
      %p184 = scmp.eq.s32.totalorder %s31, 1
      %p185 = scmp.ne.s32.totalorder %s180, %s182
      %p186 = scmp.eq.s32.totalorder %s31, 0
      %p187 = por %p185, %p186
      %p188 = scmp.ne.s32.totalorder %s180, %s182
      %p189 = scmp.eq.s32.totalorder %s36, 1
      %p190 = por %p188, %p189
      %p191 = scmp.ne.s32.totalorder %s182, %s183
      %p192 = scmp.eq.s32.totalorder %s36, 0
      %p193 = por %p191, %p192
      %p194 = scmp.ne.s32.totalorder %s182, %s183
      %p195 = scmp.eq.s32.totalorder %s37, 1
      %p196 = por %p194, %p195
      %p198 = scmp.ne.s32.totalorder %s183, %s197
      %p199 = scmp.eq.s32.totalorder %s37, 0
      %p200 = por %p198, %p199
      %s202 = sadd.s32 %s201, 1
      %p205 = scmp.eq.s32.totalorder %s31, 1
      %p206 = scmp.ne.s32.totalorder %s201, %s203
      %p207 = scmp.eq.s32.totalorder %s31, 0
      %p208 = por %p206, %p207
      %p209 = scmp.ne.s32.totalorder %s201, %s203
      %p210 = scmp.eq.s32.totalorder %s36, 1
      %p211 = por %p209, %p210
      %p212 = scmp.ne.s32.totalorder %s203, %s204
      %p213 = scmp.eq.s32.totalorder %s36, 0
      %p214 = por %p212, %p213
      %p215 = scmp.ne.s32.totalorder %s203, %s204
      %p216 = scmp.eq.s32.totalorder %s37, 1
      %p217 = por %p215, %p216
      %p219 = scmp.ne.s32.totalorder %s204, %s218
      %p220 = scmp.eq.s32.totalorder %s37, 0
      %p221 = por %p219, %p220
      %s223 = sadd.s32 %s222, 1
      %p226 = scmp.eq.s32.totalorder %s31, 1
      %p227 = scmp.ne.s32.totalorder %s222, %s224
      %p228 = scmp.eq.s32.totalorder %s31, 0
      %p229 = por %p227, %p228
      %p230 = scmp.ne.s32.totalorder %s222, %s224
      %p231 = scmp.eq.s32.totalorder %s36, 1
      %p232 = por %p230, %p231
      %p233 = scmp.ne.s32.totalorder %s224, %s225
      %p234 = scmp.eq.s32.totalorder %s36, 0
      %p235 = por %p233, %p234
      %p236 = scmp.ne.s32.totalorder %s224, %s225
      %p237 = scmp.eq.s32.totalorder %s37, 1
      %p238 = por %p236, %p237
      %p240 = scmp.ne.s32.totalorder %s225, %s239
      %p241 = scmp.eq.s32.totalorder %s37, 0
      %p242 = por %p240, %p241
      %s243 = ssub.s32 %s31, %s38
      %p244 = scmp.eq.s32.totalorder %s243, 0
      %s246 = sadd.s32 %s245, 1
      %s247 = scalar_select %p244, %s245, %s246
      %p250 = pneg %p244
      %p251 = scmp.eq.s32.totalorder %s31, 1
      %p252 = por %p250, %p251
      %p253 = scmp.ne.s32.totalorder %s245, %s248
      %p254 = scmp.eq.s32.totalorder %s31, 0
      %p255 = por %p253, %p254
      %p256 = scmp.ne.s32.totalorder %s245, %s248
      %p257 = scmp.eq.s32.totalorder %s36, 1
      %p258 = por %p256, %p257
      %p259 = scmp.ne.s32.totalorder %s248, %s249
      %p260 = scmp.eq.s32.totalorder %s36, 0
      %p261 = por %p259, %p260
      %p262 = scmp.ne.s32.totalorder %s248, %s249
      %p263 = scmp.eq.s32.totalorder %s37, 1
      %p264 = por %p262, %p263
      %p266 = scmp.ne.s32.totalorder %s249, %s265
      %p267 = scmp.eq.s32.totalorder %s37, 0
      %p268 = por %p266, %p267
      %s269 = ssub.s32 %s31, %s38
      %p270 = scmp.eq.s32.totalorder %s269, 0
      %s272 = sadd.s32 %s271, 1
      %s273 = scalar_select %p270, %s271, %s272
      %p276 = pneg %p270
      %p277 = scmp.eq.s32.totalorder %s31, 1
      %p278 = por %p276, %p277
      %p279 = scmp.ne.s32.totalorder %s271, %s274
      %p280 = scmp.eq.s32.totalorder %s31, 0
      %p281 = por %p279, %p280
      %p282 = scmp.ne.s32.totalorder %s271, %s274
      %p283 = scmp.eq.s32.totalorder %s36, 1
      %p284 = por %p282, %p283
      %p285 = scmp.ne.s32.totalorder %s274, %s275
      %p286 = scmp.eq.s32.totalorder %s36, 0
      %p287 = por %p285, %p286
      %p288 = scmp.ne.s32.totalorder %s274, %s275
      %p289 = scmp.eq.s32.totalorder %s37, 1
      %p290 = por %p288, %p289
      %p292 = scmp.ne.s32.totalorder %s275, %s291
      %p293 = scmp.eq.s32.totalorder %s37, 0
      %p294 = por %p292, %p293
      %p295 = scmp.le.s32.totalorder 1, %s31
      %p296 = scmp.lt.s32.totalorder %s31, 3
      %p297 = pnand %p295, %p296
      %p298 = pneg %p297
      // Predicated region
      $region9: #{tpu_custom_call.1} parent=5 // pred_check
        _
      $region10: #{tpu_custom_call.1} parent=5 // pred_check_branch
        %300 = sbr.rel (%p297) target = $region12
      $region11: #{tpu_custom_call.1} parent=5 // pred_region
        %s301 = ssub.s32 %s31, 1
        // Predicated region
        $region13: #{tpu_custom_call.1} parent=11 // pred_check
          %p302 = pneg %p130
        $region14: #{tpu_custom_call.1} parent=11 // pred_check_branch
          %304 = sbr.rel (%p302) target = $region16
        $region15: #{tpu_custom_call.1} parent=11 // pred_region
          %306 = vsyncadd [#allocation9], 0
          %s307 = sshll.u32 %s3, 4
          %s308 = int_to_ptr.hbm [resolvable:$true] %s307
          %s309 = sshll.u32 [#allocation8], 4
          %s310 = int_to_ptr.vmem [resolvable:$true] %s309
          %315 = dma.hbm_to_vmem [thread:$0]  %s308, 512, %s310, [#allocation9], 128, 128, 8
        $region16: #{tpu_custom_call.1} parent=11 // pred_fallthru
          _
        // Predicated region
        $region17: #{tpu_custom_call.1} parent=11 // pred_check
          %p316 = pneg %p151
        $region18: #{tpu_custom_call.1} parent=11 // pred_check_branch
          %318 = sbr.rel (%p316) target = $region20
        $region19: #{tpu_custom_call.1} parent=11 // pred_region
          %320 = vsyncadd [#allocation9], 0
          %s321 = sshll.u32 %s4, 4
          %s322 = int_to_ptr.hbm [resolvable:$true] %s321
          %s323 = sshll.u32 [#allocation10], 4
          %s324 = int_to_ptr.vmem [resolvable:$true] %s323
          %329 = dma.hbm_to_vmem [thread:$0]  %s322, 512, %s324, [#allocation9], 128, 128, 8
        $region20: #{tpu_custom_call.1} parent=11 // pred_fallthru
          _
        // Predicated region
        $region21: #{tpu_custom_call.1} parent=11 // pred_check
          %p330 = pneg %p172
        $region22: #{tpu_custom_call.1} parent=11 // pred_check_branch
          %332 = sbr.rel (%p330) target = $region24
        $region23: #{tpu_custom_call.1} parent=11 // pred_region
          %334 = vsyncadd [#allocation12], 0
          %s335 = sshll.u32 %s5, 4
          %s336 = int_to_ptr.hbm [resolvable:$true] %s335
          %s337 = sshll.u32 [#allocation11], 4
          %s338 = int_to_ptr.vmem [resolvable:$true] %s337
          %343 = dma.hbm_to_vmem [thread:$0]  %s336, 512, %s338, [#allocation12], 128, 128, 8
        $region24: #{tpu_custom_call.1} parent=11 // pred_fallthru
          _
        // Predicated region
        $region25: #{tpu_custom_call.1} parent=11 // pred_check
          %p344 = pneg %p193
        $region26: #{tpu_custom_call.1} parent=11 // pred_check_branch
          %346 = sbr.rel (%p344) target = $region28
        $region27: #{tpu_custom_call.1} parent=11 // pred_region
          %348 = vsyncadd [#allocation12], 0
          %s349 = sshll.u32 %s6, 4
          %s350 = int_to_ptr.hbm [resolvable:$true] %s349
          %s351 = sshll.u32 [#allocation13], 4
          %s352 = int_to_ptr.vmem [resolvable:$true] %s351
          %357 = dma.hbm_to_vmem [thread:$0]  %s350, 512, %s352, [#allocation12], 128, 128, 8
        $region28: #{tpu_custom_call.1} parent=11 // pred_fallthru
          _
        // Predicated region
        $region29: #{tpu_custom_call.1} parent=11 // pred_check
          %p358 = pneg %p214
        $region30: #{tpu_custom_call.1} parent=11 // pred_check_branch
          %360 = sbr.rel (%p358) target = $region32
        $region31: #{tpu_custom_call.1} parent=11 // pred_region
          _
        $region32: #{tpu_custom_call.1} parent=11 // pred_fallthru
          _
        // Predicated region
        $region33: #{tpu_custom_call.1} parent=11 // pred_check
          %p361 = pneg %p235
        $region34: #{tpu_custom_call.1} parent=11 // pred_check_branch
          %363 = sbr.rel (%p361) target = $region36
        $region35: #{tpu_custom_call.1} parent=11 // pred_region
          _
        $region36: #{tpu_custom_call.1} parent=11 // pred_fallthru
          _
      $region12: #{tpu_custom_call.1} parent=5 // pred_fallthru
        _
      %p364 = scmp.lt.s32.totalorder %s31, 2
      // Predicated region
      $region37: #{tpu_custom_call.1} parent=5 // pred_check
        %p365 = pneg %p364
      $region38: #{tpu_custom_call.1} parent=5 // pred_check_branch
        %367 = sbr.rel (%p365) target = $region40
      $region39: #{tpu_custom_call.1} parent=5 // pred_region
        // Predicated region
        $region41: #{tpu_custom_call.1} parent=39 // pred_check
          %p368 = pneg %p51
        $region42: #{tpu_custom_call.1} parent=39 // pred_check_branch
          %370 = sbr.rel (%p368) target = $region44
        $region43: #{tpu_custom_call.1} parent=39 // pred_region
          %s371 = sand.u32 %s41, 1
          %s372 = scalar_lea.sflag [#allocation3], %s371
          %s373 = sand.u32 %s41, 1
          %s374 = smul.addr %s373, 8
          %s375 = scalar_lea.vmem [#allocation2], %s374
          %377 = vsyncadd %s372, 0
          %s378 = smul.addr %s31, 8
          %s379 = scalar_lea.hbm %s0, %s378
          %s381 = sshll.u32 %s379, 4
          %s382 = int_to_ptr.hbm [resolvable:$true] %s381
          %s383 = sshll.u32 %s375, 4
          %s384 = int_to_ptr.vmem [resolvable:$true] %s383
          %386 = dma.hbm_to_vmem [thread:$0]  %s382, 128, %s384, %s372
        $region44: #{tpu_custom_call.1} parent=39 // pred_fallthru
          _
        // Predicated region
        $region45: #{tpu_custom_call.1} parent=39 // pred_check
          %p387 = pneg %p77
        $region46: #{tpu_custom_call.1} parent=39 // pred_check_branch
          %389 = sbr.rel (%p387) target = $region48
        $region47: #{tpu_custom_call.1} parent=39 // pred_region
          %s390 = sand.u32 %s31, 1
          %s391 = scalar_lea.sflag [#allocation6], %s390
          %s392 = sand.u32 %s67, 1
          %s393 = smul.addr %s392, 8
          %s394 = scalar_lea.vmem [#allocation5], %s393
          %396 = vsyncadd %s391, 0
          %s397 = smul.addr %s31, 8
          %s398 = scalar_lea.hbm %s1, %s397
          %s400 = sshll.u32 %s398, 4
          %s401 = int_to_ptr.hbm [resolvable:$true] %s400
          %s402 = sshll.u32 %s394, 4
          %s403 = int_to_ptr.vmem [resolvable:$true] %s402
          %405 = dma.hbm_to_vmem [thread:$0]  %s401, 128, %s403, %s391
        $region48: #{tpu_custom_call.1} parent=39 // pred_fallthru
          _
        // Predicated region
        $region49: #{tpu_custom_call.1} parent=39 // pred_check
          %p406 = pneg %p103
        $region50: #{tpu_custom_call.1} parent=39 // pred_check_branch
          %408 = sbr.rel (%p406) target = $region52
        $region51: #{tpu_custom_call.1} parent=39 // pred_region
          %s409 = sand.u32 %s31, 1
          %s410 = scalar_lea.sflag [#allocation6], %s409
          %s411 = sand.u32 %s93, 1
          %s412 = smul.addr %s411, 8
          %s413 = scalar_lea.vmem [#allocation7], %s412
          %415 = vsyncadd %s410, 0
          %s416 = smul.addr %s31, 8
          %s417 = scalar_lea.hbm %s2, %s416
          %s419 = sshll.u32 %s417, 4
          %s420 = int_to_ptr.hbm [resolvable:$true] %s419
          %s421 = sshll.u32 %s413, 4
          %s422 = int_to_ptr.vmem [resolvable:$true] %s421
          %424 = dma.hbm_to_vmem [thread:$0]  %s420, 128, %s422, %s410
        $region52: #{tpu_custom_call.1} parent=39 // pred_fallthru
          _
      $region40: #{tpu_custom_call.1} parent=5 // pred_fallthru
        _
      %p425 = scmp.le.s32.totalorder 1, %s31
      %p426 = scmp.lt.s32.totalorder %s31, 3
      %p427 = pnand %p425, %p426
      %p428 = pneg %p427
      // Predicated region
      $region53: #{tpu_custom_call.1} parent=5 // pred_check
        _
      $region54: #{tpu_custom_call.1} parent=5 // pred_check_branch
        %430 = sbr.rel (%p427) target = $region56
      $region55: #{tpu_custom_call.1} parent=5 // pred_region
        %s431 = ssub.s32 %s31, 1
        %s432 = sand.u32 %s44, 1
        %s433 = scalar_lea.sflag [#allocation3], %s432
        %s434 = sand.u32 %s44, 1
        %s435 = smul.addr %s434, 8
        %s436 = scalar_lea.vmem [#allocation2], %s435
        // Predicated region
        $region57: #{tpu_custom_call.1} parent=55 // pred_check
          %p437 = pneg %p57
        $region58: #{tpu_custom_call.1} parent=55 // pred_check_branch
          %439 = sbr.rel (%p437) target = $region60
        $region59: #{tpu_custom_call.1} parent=55 // pred_region
          %441 = dma.done %s433, 128
        $region60: #{tpu_custom_call.1} parent=55 // pred_fallthru
          _
        %s442 = sand.u32 %s36, 1
        %s443 = scalar_lea.sflag [#allocation6], %s442
        %s444 = sand.u32 %s70, 1
        %s445 = smul.addr %s444, 8
        %s446 = scalar_lea.vmem [#allocation5], %s445
        // Predicated region
        $region61: #{tpu_custom_call.1} parent=55 // pred_check
          %p447 = pneg %p83
        $region62: #{tpu_custom_call.1} parent=55 // pred_check_branch
          %449 = sbr.rel (%p447) target = $region64
        $region63: #{tpu_custom_call.1} parent=55 // pred_region
          %451 = dma.done %s443, 128
        $region64: #{tpu_custom_call.1} parent=55 // pred_fallthru
          _
        %s452 = sand.u32 %s36, 1
        %s453 = scalar_lea.sflag [#allocation6], %s452
        %s454 = sand.u32 %s96, 1
        %s455 = smul.addr %s454, 8
        %s456 = scalar_lea.vmem [#allocation7], %s455
        // Predicated region
        $region65: #{tpu_custom_call.1} parent=55 // pred_check
          %p457 = pneg %p109
        $region66: #{tpu_custom_call.1} parent=55 // pred_check_branch
          %459 = sbr.rel (%p457) target = $region68
        $region67: #{tpu_custom_call.1} parent=55 // pred_region
          %461 = dma.done %s453, 128
        $region68: #{tpu_custom_call.1} parent=55 // pred_fallthru
          _
        // Predicated region
        $region69: #{tpu_custom_call.1} parent=55 // pred_check
          %p462 = pneg %p130
        $region70: #{tpu_custom_call.1} parent=55 // pred_check_branch
          %464 = sbr.rel (%p462) target = $region72
        $region71: #{tpu_custom_call.1} parent=55 // pred_region
          %466 = dma.done [#allocation9], 512
        $region72: #{tpu_custom_call.1} parent=55 // pred_fallthru
          _
        // Predicated region
        $region73: #{tpu_custom_call.1} parent=55 // pred_check
          %p467 = pneg %p151
        $region74: #{tpu_custom_call.1} parent=55 // pred_check_branch
          %469 = sbr.rel (%p467) target = $region76
        $region75: #{tpu_custom_call.1} parent=55 // pred_region
          %471 = dma.done [#allocation9], 512
        $region76: #{tpu_custom_call.1} parent=55 // pred_fallthru
          _
        // Predicated region
        $region77: #{tpu_custom_call.1} parent=55 // pred_check
          %p472 = pneg %p172
        $region78: #{tpu_custom_call.1} parent=55 // pred_check_branch
          %474 = sbr.rel (%p472) target = $region80
        $region79: #{tpu_custom_call.1} parent=55 // pred_region
          %476 = dma.done [#allocation12], 512
        $region80: #{tpu_custom_call.1} parent=55 // pred_fallthru
          _
        // Predicated region
        $region81: #{tpu_custom_call.1} parent=55 // pred_check
          %p477 = pneg %p193
        $region82: #{tpu_custom_call.1} parent=55 // pred_check_branch
          %479 = sbr.rel (%p477) target = $region84
        $region83: #{tpu_custom_call.1} parent=55 // pred_region
          %481 = dma.done [#allocation12], 512
        $region84: #{tpu_custom_call.1} parent=55 // pred_fallthru
          _
        %s482 = sand.u32 %s44, 1
        %s483 = scalar_lea.sflag [#allocation3], %s482
        %s484 = sand.u32 %s44, 1
        %s485 = smul.addr %s484, 8
        %s486 = scalar_lea.vmem [#allocation2], %s485
        %p487 = pneg %p57
        %p488 = pneg %p54
        %s489 = sand.u32 %s36, 1
        %s490 = scalar_lea.sflag [#allocation6], %s489
        %s491 = sand.u32 %s70, 1
        %s492 = smul.addr %s491, 8
        %s493 = scalar_lea.vmem [#allocation5], %s492
        %p494 = pneg %p83
        %p495 = pneg %p80
        %s496 = sand.u32 %s36, 1
        %s497 = scalar_lea.sflag [#allocation6], %s496
        %s498 = sand.u32 %s96, 1
        %s499 = smul.addr %s498, 8
        %s500 = scalar_lea.vmem [#allocation7], %s499
        %p501 = pneg %p109
        %p502 = pneg %p106
        %p503 = pneg %p130
        %p504 = pneg %p127
        %p505 = pneg %p151
        %p506 = pneg %p148
        %p507 = pneg %p172
        %p508 = pneg %p169
        %p509 = pneg %p193
        %p510 = pneg %p190
        %p511 = pneg %p214
        %p512 = pneg %p211
        %p513 = pneg %p235
        %p514 = pneg %p232
        %p515 = pneg %p261
        %p516 = pneg %p258
        %s517 = sand.u32 %s248, 1
        %s518 = scalar_lea.sflag [#allocation4], %s517
        %s519 = sand.u32 %s248, 1
        %s520 = smul.addr %s519, 8
        %s521 = scalar_lea.vmem [#allocation14], %s520
        %p522 = pneg %p287
        %p523 = pneg %p284
        %s524 = sand.u32 %s274, 1
        %s525 = scalar_lea.sflag [#allocation16], %s524
        %s526 = sand.u32 %s274, 1
        %s527 = smul.addr %s526, 32
        %s528 = scalar_lea.vmem [#allocation15], %s527
        %v529 = vld [vmem:[%s436] sm:$0xff]
        %v530 = vld [vmem:[%s446] sm:$0xff]
        %v531 = vld [vmem:[%s456] sm:$0xff]
        %v532 = vld [vmem:[#allocation8] sm:$0xff]
        %v533 = vld [vmem:[#allocation8 + $0x8] sm:$0xff]
        %v534 = vld [vmem:[#allocation8 + $0x10] sm:$0xff]
        %v535 = vld [vmem:[#allocation8 + $0x18] sm:$0xff]
        %vm536 = vcmask 261120
        %v538 = vsel %vm536, %v529, 0
        %540 = vmatpush.msra.mxu0 0.0
        %541 = vmatpush.msra.mxu0 0.0
        %542 = vmatpush.msra.mxu0 0.0
        %543 = vmatpush.msra.mxu0 0.0
        %544 = vmatpush.msra.mxu0 0.0
        %545 = vmatpush.msra.mxu0 0.0
        %546 = vmatpush.msra.mxu0 0.0
        %547 = vmatpush.msra.mxu0 0.0
        %548 = vmatpush.msra.mxu0 0.0
        %549 = vmatpush.msra.mxu0 0.0
        %550 = vmatpush.msra.mxu0 0.0
        %551 = vmatpush.msra.mxu0 0.0
        %552 = vmatpush.msra.mxu0 %v535
        %553 = vmatpush.msra.mxu0 %v534
        %554 = vmatpush.msra.mxu0 %v533
        %555 = vmatpush.msra.mxu0 %v532
        %556 = vmatmul.f32.gmra.mxu0 %v538
        %v557 = vpop.f32.mrf.mxu0
        %v558 = vadd.f32 0.0, %v557
        %559 = vdwg.mxu0
        %v560 = vld [vmem:[#allocation10] sm:$0xff]
        %v561 = vld [vmem:[#allocation10 + $0x8] sm:$0xff]
        %v562 = vld [vmem:[#allocation10 + $0x10] sm:$0xff]
        %v563 = vld [vmem:[#allocation10 + $0x18] sm:$0xff]
        %v565 = vsel %vm536, %v530, 0
        %567 = vmatpush.msra.mxu0 0.0
        %568 = vmatpush.msra.mxu0 0.0
        %569 = vmatpush.msra.mxu0 0.0
        %570 = vmatpush.msra.mxu0 0.0
        %571 = vmatpush.msra.mxu0 0.0
        %572 = vmatpush.msra.mxu0 0.0
        %573 = vmatpush.msra.mxu0 0.0
        %574 = vmatpush.msra.mxu0 0.0
        %575 = vmatpush.msra.mxu0 0.0
        %576 = vmatpush.msra.mxu0 0.0
        %577 = vmatpush.msra.mxu0 0.0
        %578 = vmatpush.msra.mxu0 0.0
        %579 = vmatpush.msra.mxu0 %v563
        %580 = vmatpush.msra.mxu0 %v562
        %581 = vmatpush.msra.mxu0 %v561
        %582 = vmatpush.msra.mxu0 %v560
        %583 = vmatmul.f32.gmra.mxu0 %v565
        %v584 = vpop.f32.mrf.mxu0
        %v585 = vadd.f32 0.0, %v584
        %586 = vdwg.mxu0
        %v587 = vld [vmem:[#allocation11] sm:$0xff]
        %v588 = vld [vmem:[#allocation11 + $0x8] sm:$0xff]
        %v589 = vld [vmem:[#allocation11 + $0x10] sm:$0xff]
        %v590 = vld [vmem:[#allocation11 + $0x18] sm:$0xff]
        %v592 = vsel %vm536, %v531, 0
        %594 = vmatpush.msra.mxu0 0.0
        %595 = vmatpush.msra.mxu0 0.0
        %596 = vmatpush.msra.mxu0 0.0
        %597 = vmatpush.msra.mxu0 0.0
        %598 = vmatpush.msra.mxu0 0.0
        %599 = vmatpush.msra.mxu0 0.0
        %600 = vmatpush.msra.mxu0 0.0
        %601 = vmatpush.msra.mxu0 0.0
        %602 = vmatpush.msra.mxu0 0.0
        %603 = vmatpush.msra.mxu0 0.0
        %604 = vmatpush.msra.mxu0 0.0
        %605 = vmatpush.msra.mxu0 0.0
        %606 = vmatpush.msra.mxu0 %v590
        %607 = vmatpush.msra.mxu0 %v589
        %608 = vmatpush.msra.mxu0 %v588
        %609 = vmatpush.msra.mxu0 %v587
        %610 = vmatmul.f32.gmra.mxu0 %v592
        %v611 = vpop.f32.mrf.mxu0
        %v612 = vadd.f32 0.0, %v611
        %613 = vdwg.mxu0
        %v614 = vmul.f32 %v558, 0.35355338
        %vm615 = vcmask 64512
        %v617 = vsel %vm615, %v614, 0
        %v620 = vsel %vm615, %v585, 0
        %622 = vmatpush.xpose.msra.mxu0 0.0
        %623 = vmatpush.xpose.msra.mxu0 0.0
        %624 = vmatpush.xpose.msra.mxu0 0.0
        %625 = vmatpush.xpose.msra.mxu0 0.0
        %626 = vmatpush.xpose.msra.mxu0 0.0
        %627 = vmatpush.xpose.msra.mxu0 0.0
        %628 = vmatpush.xpose.msra.mxu0 0.0
        %629 = vmatpush.xpose.msra.mxu0 0.0
        %630 = vmatpush.xpose.msra.mxu0 0.0
        %631 = vmatpush.xpose.msra.mxu0 0.0
        %632 = vmatpush.xpose.msra.mxu0 0.0
        %633 = vmatpush.xpose.msra.mxu0 0.0
        %634 = vmatpush.xpose.msra.mxu0 0.0
        %635 = vmatpush.xpose.msra.mxu0 0.0
        %636 = vmatpush.xpose.msra.mxu0 0.0
        %637 = vmatpush.xpose.msra.mxu0 %v620
        %638 = vmatmul.f32.gmra.mxu0 %v617
        %v639 = vpop.f32.mrf.mxu0
        %v640 = vadd.f32 0.0, %v639
        %641 = vdwg.mxu0
        %v642 = vsel %vm615, %v640, -inf
        %643 = vmax.xlane.f32.xlu0 %v642
        %v644 = vpop.xlane.xlu0 %643
        %v645 = vsub.f32 %v640, %v644
        %v646 = vmul.f32 %v645, 1.442695
        %v647 = vpow.pop %v646
        %v648 = vsel %vm615, %v647, 0.0
        %649 = vadd.xlane.f32.xlu0 %v648
        %v650 = vpop.xlane.xlu0 %649
        %v651 = vrcp.pop %v650
        %v652 = vmul.f32 %v650, %v651
        %v653 = vsub.f32 1.0, %v652
        %v654 = vmul.f32 %v651, %v653
        %v655 = vadd.f32 %v651, %v654
        %vm656 = vweird.f32 %v650
        %vm657 = vweird.f32 %v651
        %vm658 = vmor %vm656, %vm657
        %v659 = vsel %vm658, %v651, %v655
        %v660 = vand.u32 2147483647, %v650
        %vm661 = vcmp.eq.f32.partialorder %v660, 8.507059e+37
        %v662 = vand.u32 %v650, 2147483648
        %v663 = vor.u32 1.1754944e-38, %v662
        %v664 = vsel %vm661, %v663, %v659
        %v665 = vmul.f32 %v647, %v664
        %666 = vst.msk [vmem:[%s528] sm:$0xff] %vm615, %v665
        %v668 = vsel %vm615, %v665, 0
        %670 = vmatpush.msra.mxu0 0.0
        %671 = vmatpush.msra.mxu0 0.0
        %672 = vmatpush.msra.mxu0 0.0
        %673 = vmatpush.msra.mxu0 0.0
        %674 = vmatpush.msra.mxu0 0.0
        %675 = vmatpush.msra.mxu0 0.0
        %676 = vmatpush.msra.mxu0 0.0
        %677 = vmatpush.msra.mxu0 0.0
        %678 = vmatpush.msra.mxu0 0.0
        %679 = vmatpush.msra.mxu0 0.0
        %680 = vmatpush.msra.mxu0 0.0
        %681 = vmatpush.msra.mxu0 0.0
        %682 = vmatpush.msra.mxu0 0.0
        %683 = vmatpush.msra.mxu0 0.0
        %684 = vmatpush.msra.mxu0 0.0
        %685 = vmatpush.msra.mxu0 %v612
        %686 = vmatmul.f32.gmra.mxu0 %v668
        %v687 = vpop.f32.mrf.mxu0
        %v688 = vadd.f32 0.0, %v687
        %689 = vdwg.mxu0
        %690 = vrot.lane.b32.xlu0 %v614, 120
        %v691 = vpop.permute.xlu0 %690
        %692 = vrot.lane.b32.xlu0 %v585, 120
        %v693 = vpop.permute.xlu0 %692
        %v694 = vsel %vm615, %v691, 0
        %v696 = vsel %vm615, %v693, 0
        %698 = vmatpush.xpose.msra.mxu0 0.0
        %699 = vmatpush.xpose.msra.mxu0 0.0
        %700 = vmatpush.xpose.msra.mxu0 0.0
        %701 = vmatpush.xpose.msra.mxu0 0.0
        %702 = vmatpush.xpose.msra.mxu0 0.0
        %703 = vmatpush.xpose.msra.mxu0 0.0
        %704 = vmatpush.xpose.msra.mxu0 0.0
        %705 = vmatpush.xpose.msra.mxu0 0.0
        %706 = vmatpush.xpose.msra.mxu0 0.0
        %707 = vmatpush.xpose.msra.mxu0 0.0
        %708 = vmatpush.xpose.msra.mxu0 0.0
        %709 = vmatpush.xpose.msra.mxu0 0.0
        %710 = vmatpush.xpose.msra.mxu0 0.0
        %711 = vmatpush.xpose.msra.mxu0 0.0
        %712 = vmatpush.xpose.msra.mxu0 0.0
        %713 = vmatpush.xpose.msra.mxu0 %v696
        %714 = vmatmul.f32.gmra.mxu0 %v694
        %v715 = vpop.f32.mrf.mxu0
        %v716 = vadd.f32 0.0, %v715
        %717 = vdwg.mxu0
        %v718 = vsel %vm615, %v716, -inf
        %719 = vmax.xlane.f32.xlu0 %v718
        %v720 = vpop.xlane.xlu0 %719
        %v721 = vsub.f32 %v716, %v720
        %v722 = vmul.f32 %v721, 1.442695
        %v723 = vpow.pop %v722
        %v724 = vsel %vm615, %v723, 0.0
        %725 = vadd.xlane.f32.xlu0 %v724
        %v726 = vpop.xlane.xlu0 %725
        %v727 = vrcp.pop %v726
        %v728 = vmul.f32 %v726, %v727
        %v729 = vsub.f32 1.0, %v728
        %v730 = vmul.f32 %v727, %v729
        %v731 = vadd.f32 %v727, %v730
        %vm732 = vweird.f32 %v726
        %vm733 = vweird.f32 %v727
        %vm734 = vmor %vm732, %vm733
        %v735 = vsel %vm734, %v727, %v731
        %v736 = vand.u32 2147483647, %v726
        %vm737 = vcmp.eq.f32.partialorder %v736, 8.507059e+37
        %v738 = vand.u32 %v726, 2147483648
        %v739 = vor.u32 1.1754944e-38, %v738
        %v740 = vsel %vm737, %v739, %v735
        %v741 = vmul.f32 %v723, %v740
        %s742 = scalar_lea.vmem %s528, 8 [#allocation15]
        %743 = vst.msk [vmem:[%s742] sm:$0xff] %vm615, %v741
        %745 = vrot.lane.b32.xlu0 %v612, 120
        %v746 = vpop.permute.xlu0 %745
        %v749 = vsel %vm615, %v741, 0
        %751 = vmatpush.msra.mxu0 0.0
        %752 = vmatpush.msra.mxu0 0.0
        %753 = vmatpush.msra.mxu0 0.0
        %754 = vmatpush.msra.mxu0 0.0
        %755 = vmatpush.msra.mxu0 0.0
        %756 = vmatpush.msra.mxu0 0.0
        %757 = vmatpush.msra.mxu0 0.0
        %758 = vmatpush.msra.mxu0 0.0
        %759 = vmatpush.msra.mxu0 0.0
        %760 = vmatpush.msra.mxu0 0.0
        %761 = vmatpush.msra.mxu0 0.0
        %762 = vmatpush.msra.mxu0 0.0
        %763 = vmatpush.msra.mxu0 0.0
        %764 = vmatpush.msra.mxu0 0.0
        %765 = vmatpush.msra.mxu0 0.0
        %766 = vmatpush.msra.mxu0 %v746
        %767 = vmatmul.f32.gmra.mxu0 %v749
        %v768 = vpop.f32.mrf.mxu0
        %v769 = vadd.f32 0.0, %v768
        %770 = vdwg.mxu0
        %771 = vrot.lane.b32.xlu0 %v614, 112
        %v772 = vpop.permute.xlu0 %771
        %773 = vrot.lane.b32.xlu0 %v585, 112
        %v774 = vpop.permute.xlu0 %773
        %v775 = vsel %vm615, %v772, 0
        %v777 = vsel %vm615, %v774, 0
        %779 = vmatpush.xpose.msra.mxu0 0.0
        %780 = vmatpush.xpose.msra.mxu0 0.0
        %781 = vmatpush.xpose.msra.mxu0 0.0
        %782 = vmatpush.xpose.msra.mxu0 0.0
        %783 = vmatpush.xpose.msra.mxu0 0.0
        %784 = vmatpush.xpose.msra.mxu0 0.0
        %785 = vmatpush.xpose.msra.mxu0 0.0
        %786 = vmatpush.xpose.msra.mxu0 0.0
        %787 = vmatpush.xpose.msra.mxu0 0.0
        %788 = vmatpush.xpose.msra.mxu0 0.0
        %789 = vmatpush.xpose.msra.mxu0 0.0
        %790 = vmatpush.xpose.msra.mxu0 0.0
        %791 = vmatpush.xpose.msra.mxu0 0.0
        %792 = vmatpush.xpose.msra.mxu0 0.0
        %793 = vmatpush.xpose.msra.mxu0 0.0
        %794 = vmatpush.xpose.msra.mxu0 %v777
        %795 = vmatmul.f32.gmra.mxu0 %v775
        %v796 = vpop.f32.mrf.mxu0
        %v797 = vadd.f32 0.0, %v796
        %798 = vdwg.mxu0
        %v799 = vsel %vm615, %v797, -inf
        %800 = vmax.xlane.f32.xlu0 %v799
        %v801 = vpop.xlane.xlu0 %800
        %v802 = vsub.f32 %v797, %v801
        %v803 = vmul.f32 %v802, 1.442695
        %v804 = vpow.pop %v803
        %v805 = vsel %vm615, %v804, 0.0
        %806 = vadd.xlane.f32.xlu0 %v805
        %v807 = vpop.xlane.xlu0 %806
        %v808 = vrcp.pop %v807
        %v809 = vmul.f32 %v807, %v808
        %v810 = vsub.f32 1.0, %v809
        %v811 = vmul.f32 %v808, %v810
        %v812 = vadd.f32 %v808, %v811
        %vm813 = vweird.f32 %v807
        %vm814 = vweird.f32 %v808
        %vm815 = vmor %vm813, %vm814
        %v816 = vsel %vm815, %v808, %v812
        %v817 = vand.u32 2147483647, %v807
        %vm818 = vcmp.eq.f32.partialorder %v817, 8.507059e+37
        %v819 = vand.u32 %v807, 2147483648
        %v820 = vor.u32 1.1754944e-38, %v819
        %v821 = vsel %vm818, %v820, %v816
        %v822 = vmul.f32 %v804, %v821
        %s823 = scalar_lea.vmem %s528, 16 [#allocation15]
        %824 = vst.msk [vmem:[%s823] sm:$0xff] %vm615, %v822
        %825 = vrot.lane.b32.xlu0 %v612, 112
        %v826 = vpop.permute.xlu0 %825
        %v829 = vsel %vm615, %v822, 0
        %831 = vmatpush.msra.mxu0 0.0
        %832 = vmatpush.msra.mxu0 0.0
        %833 = vmatpush.msra.mxu0 0.0
        %834 = vmatpush.msra.mxu0 0.0
        %835 = vmatpush.msra.mxu0 0.0
        %836 = vmatpush.msra.mxu0 0.0
        %837 = vmatpush.msra.mxu0 0.0
        %838 = vmatpush.msra.mxu0 0.0
        %839 = vmatpush.msra.mxu0 0.0
        %840 = vmatpush.msra.mxu0 0.0
        %841 = vmatpush.msra.mxu0 0.0
        %842 = vmatpush.msra.mxu0 0.0
        %843 = vmatpush.msra.mxu0 0.0
        %844 = vmatpush.msra.mxu0 0.0
        %845 = vmatpush.msra.mxu0 0.0
        %846 = vmatpush.msra.mxu0 %v826
        %847 = vmatmul.f32.gmra.mxu0 %v829
        %v848 = vpop.f32.mrf.mxu0
        %v849 = vadd.f32 0.0, %v848
        %850 = vdwg.mxu0
        %851 = vrot.lane.b32.xlu0 %v614, 104
        %v852 = vpop.permute.xlu0 %851
        %853 = vrot.lane.b32.xlu0 %v585, 104
        %v854 = vpop.permute.xlu0 %853
        %v855 = vsel %vm615, %v852, 0
        %v857 = vsel %vm615, %v854, 0
        %859 = vmatpush.xpose.msra.mxu0 0.0
        %860 = vmatpush.xpose.msra.mxu0 0.0
        %861 = vmatpush.xpose.msra.mxu0 0.0
        %862 = vmatpush.xpose.msra.mxu0 0.0
        %863 = vmatpush.xpose.msra.mxu0 0.0
        %864 = vmatpush.xpose.msra.mxu0 0.0
        %865 = vmatpush.xpose.msra.mxu0 0.0
        %866 = vmatpush.xpose.msra.mxu0 0.0
        %867 = vmatpush.xpose.msra.mxu0 0.0
        %868 = vmatpush.xpose.msra.mxu0 0.0
        %869 = vmatpush.xpose.msra.mxu0 0.0
        %870 = vmatpush.xpose.msra.mxu0 0.0
        %871 = vmatpush.xpose.msra.mxu0 0.0
        %872 = vmatpush.xpose.msra.mxu0 0.0
        %873 = vmatpush.xpose.msra.mxu0 0.0
        %874 = vmatpush.xpose.msra.mxu0 %v857
        %875 = vmatmul.f32.gmra.mxu0 %v855
        %v876 = vpop.f32.mrf.mxu0
        %v877 = vadd.f32 0.0, %v876
        %878 = vdwg.mxu0
        %v879 = vsel %vm615, %v877, -inf
        %880 = vmax.xlane.f32.xlu0 %v879
        %v881 = vpop.xlane.xlu0 %880
        %v882 = vsub.f32 %v877, %v881
        %v883 = vmul.f32 %v882, 1.442695
        %v884 = vpow.pop %v883
        %v885 = vsel %vm615, %v884, 0.0
        %886 = vadd.xlane.f32.xlu0 %v885
        %v887 = vpop.xlane.xlu0 %886
        %v888 = vrcp.pop %v887
        %v889 = vmul.f32 %v887, %v888
        %v890 = vsub.f32 1.0, %v889
        %v891 = vmul.f32 %v888, %v890
        %v892 = vadd.f32 %v888, %v891
        %vm893 = vweird.f32 %v887
        %vm894 = vweird.f32 %v888
        %vm895 = vmor %vm893, %vm894
        %v896 = vsel %vm895, %v888, %v892
        %v897 = vand.u32 2147483647, %v887
        %vm898 = vcmp.eq.f32.partialorder %v897, 8.507059e+37
        %v899 = vand.u32 %v887, 2147483648
        %v900 = vor.u32 1.1754944e-38, %v899
        %v901 = vsel %vm898, %v900, %v896
        %v902 = vmul.f32 %v884, %v901
        %s903 = scalar_lea.vmem %s528, 24 [#allocation15]
        %904 = vst.msk [vmem:[%s903] sm:$0xff] %vm615, %v902
        %905 = vrot.lane.b32.xlu0 %v612, 104
        %v906 = vpop.permute.xlu0 %905
        %v909 = vsel %vm615, %v902, 0
        %911 = vmatpush.msra.mxu0 0.0
        %912 = vmatpush.msra.mxu0 0.0
        %913 = vmatpush.msra.mxu0 0.0
        %914 = vmatpush.msra.mxu0 0.0
        %915 = vmatpush.msra.mxu0 0.0
        %916 = vmatpush.msra.mxu0 0.0
        %917 = vmatpush.msra.mxu0 0.0
        %918 = vmatpush.msra.mxu0 0.0
        %919 = vmatpush.msra.mxu0 0.0
        %920 = vmatpush.msra.mxu0 0.0
        %921 = vmatpush.msra.mxu0 0.0
        %922 = vmatpush.msra.mxu0 0.0
        %923 = vmatpush.msra.mxu0 0.0
        %924 = vmatpush.msra.mxu0 0.0
        %925 = vmatpush.msra.mxu0 0.0
        %926 = vmatpush.msra.mxu0 %v906
        %927 = vmatmul.f32.gmra.mxu0 %v909
        %v928 = vpop.f32.mrf.mxu0
        %v929 = vadd.f32 0.0, %v928
        %930 = vdwg.mxu0
        %932 = vrot.lane.b32.xlu0 %v769, 8
        %v933 = vpop.permute.xlu0 %932
        %936 = vrot.lane.b32.xlu0 %v849, 16
        %v937 = vpop.permute.xlu0 %936
        %940 = vrot.lane.b32.xlu0 %v929, 24
        %v941 = vpop.permute.xlu0 %940
        %v943 = vsel %vm615, %v688, %v933
        %vm944 = vcmask 130048
        %v945 = vsel %vm944, %v943, %v937
        %vm946 = vcmask 195584
        %v947 = vsel %vm946, %v945, %v941
        %v948 = vld [vmem:[#allocation13] sm:$0xff]
        %v949 = vld [vmem:[#allocation13 + $0x8] sm:$0xff]
        %v950 = vld [vmem:[#allocation13 + $0x10] sm:$0xff]
        %v951 = vld [vmem:[#allocation13 + $0x18] sm:$0xff]
        %v953 = vsel %vm536, %v947, 0
        %955 = vmatpush.msra.mxu0 0.0
        %956 = vmatpush.msra.mxu0 0.0
        %957 = vmatpush.msra.mxu0 0.0
        %958 = vmatpush.msra.mxu0 0.0
        %959 = vmatpush.msra.mxu0 0.0
        %960 = vmatpush.msra.mxu0 0.0
        %961 = vmatpush.msra.mxu0 0.0
        %962 = vmatpush.msra.mxu0 0.0
        %963 = vmatpush.msra.mxu0 0.0
        %964 = vmatpush.msra.mxu0 0.0
        %965 = vmatpush.msra.mxu0 0.0
        %966 = vmatpush.msra.mxu0 0.0
        %967 = vmatpush.msra.mxu0 %v951
        %968 = vmatpush.msra.mxu0 %v950
        %969 = vmatpush.msra.mxu0 %v949
        %970 = vmatpush.msra.mxu0 %v948
        %971 = vmatmul.f32.gmra.mxu0 %v953
        %v972 = vpop.f32.mrf.mxu0
        %v973 = vadd.f32 %v529, %v972
        %974 = vdwg.mxu0
        %v975 = vsel %vm536, %v973, 0.0
        %976 = vadd.xlane.f32.xlu0 %v975
        %v977 = vpop.xlane.xlu0 %976
        %v978 = vrcp.pop 32.0
        %v979 = vmul.f32 32.0, %v978
        %v980 = vsub.f32 1.0, %v979
        %v981 = vmul.f32 %v978, %v980
        %v982 = vadd.f32 %v978, %v981
        %vm983 = vweird.f32 %v978
        %v984 = vsel %vm983, %v978, %v982
        %v985 = vmul.f32 %v977, %v984
        %v986 = vsub.f32 %v973, %v985
        %v987 = vmul.f32 %v986, %v986
        %v988 = vsel %vm536, %v987, 0.0
        %989 = vadd.xlane.f32.xlu0 %v988
        %v990 = vpop.xlane.xlu0 %989
        %v991 = vmul.f32 %v990, %v984
        %v992 = vadd.f32 %v991, 1e-06
        %v993 = vrsqrt.pop %v992
        %v994 = vmul.f32 %v993, %v992
        %v995 = vmul.f32 %v994, %v993
        %v996 = vmul.f32 0.5, %v995
        %v997 = vsub.f32 1.5, %v996
        %v998 = vmul.f32 %v993, %v997
        %vm999 = vweird.f32 %v992
        %vm1000 = vweird.f32 %v993
        %vm1001 = vmor %vm999, %vm1000
        %v1002 = vsel %vm1001, %v993, %v998
        %v1003 = vmul.f32 %v986, %v1002
        %v1004 = vld [vmem:[%s7] sm:$0x1]
        %v1006 = vperm.slane %v1004, 0
        %v1008 = vmul.f32 %v1003, %v1006
        %v1009 = vld [vmem:[%s8] sm:$0x1]
        %v1011 = vperm.slane %v1009, 0
        %v1013 = vadd.f32 %v1008, %v1011
        %1014 = vst.msk [vmem:[%s521] sm:$0xff] %vm536, %v1013
        %s1015 = sand.u32 %s248, 1
        %s1016 = scalar_lea.sflag [#allocation4], %s1015
        %s1017 = sand.u32 %s248, 1
        %s1018 = smul.addr %s1017, 8
        %s1019 = scalar_lea.vmem [#allocation14], %s1018
        %s1020 = sand.u32 %s274, 1
        %s1021 = scalar_lea.sflag [#allocation16], %s1020
        %s1022 = sand.u32 %s274, 1
        %s1023 = smul.addr %s1022, 32
        %s1024 = scalar_lea.vmem [#allocation15], %s1023
        // Predicated region
        $region85: #{tpu_custom_call.1} parent=55 // pred_check
          %p1025 = pneg %p258
        $region86: #{tpu_custom_call.1} parent=55 // pred_check_branch
          %1027 = sbr.rel (%p1025) target = $region88
        $region87: #{tpu_custom_call.1} parent=55 // pred_region
          %1029 = vsyncadd %s1016, 0
          %s1030 = smul.addr %s36, 8
          %s1031 = scalar_lea.hbm %s9, %s1030
          %s1033 = sshll.u32 %s1019, 4
          %s1034 = int_to_ptr.vmem [resolvable:$true] %s1033
          %s1035 = sshll.u32 %s1031, 4
          %s1036 = int_to_ptr.hbm [resolvable:$true] %s1035
          %1038 = dma.vmem_to_hbm [thread:$0]  %s1034, 128, %s1036, %s1016
        $region88: #{tpu_custom_call.1} parent=55 // pred_fallthru
          _
        // Predicated region
        $region89: #{tpu_custom_call.1} parent=55 // pred_check
          %p1039 = pneg %p284
        $region90: #{tpu_custom_call.1} parent=55 // pred_check_branch
          %1041 = sbr.rel (%p1039) target = $region92
        $region91: #{tpu_custom_call.1} parent=55 // pred_region
          %1043 = vsyncadd %s1021, 0
          %s1044 = smul.addr %s36, 4
          %s1045 = smul.addr %s1044, 8
          %s1046 = scalar_lea.hbm %s10, %s1045
          %s1047 = sshll.u32 %s1024, 4
          %s1048 = int_to_ptr.vmem [resolvable:$true] %s1047
          %s1049 = sshll.u32 %s1046, 4
          %s1050 = int_to_ptr.hbm [resolvable:$true] %s1049
          %1055 = dma.vmem_to_hbm [thread:$0]  %s1048, 512, %s1050, %s1021, 128, 128, 8
        $region92: #{tpu_custom_call.1} parent=55 // pred_fallthru
          _
      $region56: #{tpu_custom_call.1} parent=5 // pred_fallthru
        _
      %p1056 = scmp.le.s32.totalorder 2, %s31
      // Predicated region
      $region93: #{tpu_custom_call.1} parent=5 // pred_check
        %p1057 = pneg %p1056
      $region94: #{tpu_custom_call.1} parent=5 // pred_check_branch
        %1059 = sbr.rel (%p1057) target = $region96
      $region95: #{tpu_custom_call.1} parent=5 // pred_region
        %s1060 = ssub.s32 %s31, 2
        // Predicated region
        $region97: #{tpu_custom_call.1} parent=95 // pred_check
          %p1061 = pneg %p264
        $region98: #{tpu_custom_call.1} parent=95 // pred_check_branch
          %1063 = sbr.rel (%p1061) target = $region100
        $region99: #{tpu_custom_call.1} parent=95 // pred_region
          %s1064 = sand.u32 %s249, 1
          %s1065 = scalar_lea.sflag [#allocation4], %s1064
          %s1066 = sand.u32 %s249, 1
          %s1067 = smul.addr %s1066, 8
          %s1068 = scalar_lea.vmem [#allocation14], %s1067
          %1070 = dma.done %s1065, 128
        $region100: #{tpu_custom_call.1} parent=95 // pred_fallthru
          _
        // Predicated region
        $region101: #{tpu_custom_call.1} parent=95 // pred_check
          %p1071 = pneg %p290
        $region102: #{tpu_custom_call.1} parent=95 // pred_check_branch
          %1073 = sbr.rel (%p1071) target = $region104
        $region103: #{tpu_custom_call.1} parent=95 // pred_region
          %s1074 = sand.u32 %s275, 1
          %s1075 = scalar_lea.sflag [#allocation16], %s1074
          %s1076 = sand.u32 %s275, 1
          %s1077 = smul.addr %s1076, 32
          %s1078 = scalar_lea.vmem [#allocation15], %s1077
          %1080 = dma.done %s1075, 512
        $region104: #{tpu_custom_call.1} parent=95 // pred_fallthru
          _
      $region96: #{tpu_custom_call.1} parent=5 // pred_fallthru
        _
    $region6: #{tpu_custom_call.1} parent=1 // loop_footer
      %s35 = sadd.s32 1, %s31
    $region7: #{tpu_custom_call.1} parent=1 // loop_footer_branch
      %30 = sbr.rel target = $region3
    $region8: #{tpu_custom_call.1} parent=1 // loop_exit
      _
    %1081 = vsyncpa [#allocation3], 1
    %s1082 = scalar_lea.sflag [#allocation3], 1
    %1083 = vsyncpa %s1082, 1
    %1084 = vsyncpa [#allocation6], 1
    %s1085 = scalar_lea.sflag [#allocation6], 1
    %1086 = vsyncpa %s1085, 1
    %1087 = vsyncpa [#allocation9], 1
    %1088 = vsyncpa [#allocation12], 1
    %1089 = vsyncpa [#allocation4], 1
    %s1090 = scalar_lea.sflag [#allocation4], 1
    %1091 = vsyncpa %s1090, 1
    %1092 = vsyncpa [#allocation16], 1
    %s1093 = scalar_lea.sflag [#allocation16], 1
    %1094 = vsyncpa %s1093, 1

</llo_original>
